<compile_context>
chip_gen: v7x
topology: tpu7x:2x2x1
jax: 0.10.0
libtpu: 0.0.40
codegen_flags: <defaults>
</compile_context>

<pallas_src>
import functools
import math

import numpy as np
import jax
import jax.numpy as jnp
from jax.experimental import pallas as pl
from jax.experimental.pallas import tpu as pltpu


def _round_up(x, m):
    return (x + m - 1) // m * m


def _pad_rows(a, rows):
    pad = rows - a.shape[0]
    return a if pad == 0 else jnp.pad(a, ((0, pad), (0, 0)))


def _two_tensorcore_chip():
    """True on chips where a 'parallel' grid axis spans 2 TensorCores."""
    try:
        kind = jax.devices()[0].device_kind.lower()
    except Exception:
        return False
    return ("v7" in kind) or ("v4" in kind) or ("v5p" in kind)


# ---------------------------------------------------------------------------
# Kernel.  Branch-stacked refs have a leading branch dim of size
# `num_branches` (1 when the grid iterates branches, 2 when fused in-step).
# ---------------------------------------------------------------------------
def _anchor_kernel(num_branches, num_heads, head_dim,
                   x_ref, sem_ref, cls_row_ref, cls_col_ref,
                   w_node_ref, b_node_ref, w_q_ref, b_q_ref,
                   w_o_ref, b_o_ref,
                   gamma_ref, beta_ref, head_mask_ref, row_cls_ref, col_cls_ref,
                   out_ref):
    E = num_heads * head_dim

    gamma = gamma_ref[...]              # (1, E)   f32 (shared)
    beta = beta_ref[...]                # (1, E)   f32 (shared)
    head_maskf = head_mask_ref[...]     # (CH, E)  f32 one-hot head columns
    row_cls = row_cls_ref[...]          # (CH, 1)  int32: class id of each (class,head) row
    col_cls = col_cls_ref[...]          # (1, CH)  int32: same, transposed

    for b in range(num_branches):
        x = x_ref[b]                    # (N, E)  bf16, zero-padded rows
        cls_row = cls_row_ref[b]        # (1, N)  int32, -1 for padded nodes
        cls_col = cls_col_ref[b]        # (N, 1)  int32

        # One fused MXU matmul: [xs | K | V] = x @ [W_s ; W_k W_s ; W_v W_s]^T + b
        node = jnp.dot(x, w_node_ref[b],
                       preferred_element_type=jnp.float32) + b_node_ref[b]   # (N, 3E) f32
        xs = node[:, :E]                                                      # (N, E) f32
        k_bf = node[:, E:2 * E].astype(jnp.bfloat16)
        v_bf = node[:, 2 * E:].astype(jnp.bfloat16)

        # Batched (class, head) single-query attention.  The query block has
        # one row per (class, head); each row keeps only that head's columns,
        # so a single score matmul gives all per-head scores at once.
        q = jnp.dot(sem_ref[b], w_q_ref[b],
                    preferred_element_type=jnp.float32) + b_q_ref[b]          # (CH, E) f32
        q_bf = (q * head_maskf).astype(jnp.bfloat16)                          # 1/sqrt(dh) folded in W_q

        s = jax.lax.dot_general(q_bf, k_bf, (((1,), (1,)), ((), ())),
                                preferred_element_type=jnp.float32)           # (CH, N) f32
        mask = row_cls == cls_row                                             # (CH, N) membership
        maskf = mask.astype(jnp.float32)
        s = jnp.where(mask, s, -1e30)
        m = jnp.max(s, axis=-1, keepdims=True)
        p = jnp.exp(s - m) * maskf                                            # unnormalized weights
        denom = jnp.sum(p, axis=-1, keepdims=True)
        inv = pl.reciprocal(jnp.where(denom > 0.0, denom, 1.0), approx=True)

        o = jnp.dot(p.astype(jnp.bfloat16), v_bf,
                    preferred_element_type=jnp.float32)                       # (CH, E) f32
        o = o * inv * head_maskf                                              # deferred softmax norm + head cols

        attn = jnp.dot(o.astype(jnp.bfloat16), w_o_ref[b],
                       preferred_element_type=jnp.float32)                    # (CH, E) f32

        # Head collapse + per-node class scatter in ONE bf16 matmul:
        # onehot[j, c*H+h] = (class[j] == c); summing the H rows of a class
        # concatenates the disjoint head columns; bias added once afterwards.
        onehot = (cls_col == col_cls).astype(jnp.bfloat16)                    # (N, CH)
        gathered = jnp.dot(onehot, attn.astype(jnp.bfloat16),
                           preferred_element_type=jnp.float32) + b_o_ref[b]   # (N, E) f32

        # Elementwise gate + LayerNorm over E (eps = 1e-5), all in f32.
        # NOTE: E=32 -> lane-masked store; lane-dense output slab deferred
        # to the production N-tiled version (see TODO at the top).
        prod = xs * gathered
        mean = jnp.mean(prod, axis=-1, keepdims=True)
        var = jnp.mean(jnp.square(prod - mean), axis=-1, keepdims=True)
        normed = (prod - mean) * jax.lax.rsqrt(var + 1e-5)
        out_ref[b] = (normed * gamma + beta).astype(out_ref.dtype)


# ---------------------------------------------------------------------------
# One-time parameter preprocessing (kept OUT of the per-call jitted path).
# ---------------------------------------------------------------------------
def prepare_anchor1_params(params, v_n, c_n, emb_size, num_heads=4):
    E = emb_size
    assert E % num_heads == 0
    dh = E // num_heads
    scale = 1.0 / math.sqrt(dh)
    c_pad = _round_up(max(v_n, c_n), 8)
    CH = c_pad * num_heads

    def fold(send_w, send_b, in_w, in_b, out_w, out_b):
        send_w = np.asarray(send_w, np.float64)
        send_b = np.asarray(send_b, np.float64)
        in_w = np.asarray(in_w, np.float64)
        in_b = np.asarray(in_b, np.float64)
        out_w = np.asarray(out_w, np.float64)
        out_b = np.asarray(out_b, np.float64)
        w_q, w_k, w_v = in_w[:E], in_w[E:2 * E], in_w[2 * E:]
        b_q, b_k, b_v = in_b[:E], in_b[E:2 * E], in_b[2 * E:]
        # fold the send projection into K / V:
        #   k = (x Ws^T + bs) Wk^T + bk = x (Wk Ws)^T + (Wk bs + bk)
        w_k_f, w_v_f = w_k @ send_w, w_v @ send_w
        b_k_f, b_v_f = w_k @ send_b + b_k, w_v @ send_b + b_v
        return dict(
            w_node=np.concatenate([send_w, w_k_f, w_v_f], axis=0).T,      # (E, 3E)
            b_node=np.concatenate([send_b, b_k_f, b_v_f]).reshape(1, 3 * E),
            w_q=(scale * w_q).T,                                          # (E, E), 1/sqrt(dh) folded
            b_q=(scale * b_q).reshape(1, E),
            w_o=out_w.T,                                                  # (E, E)
            b_o=out_b.reshape(1, E),
        )

    fv = fold(params["send_var_w"], params["send_var_b"],
              params["att_var_in_w"], params["att_var_in_b"],
              params["att_var_out_w"], params["att_var_out_b"])
    fc = fold(params["send_con_w"], params["send_con_b"],
              params["att_con_in_w"], params["att_con_in_b"],
              params["att_con_out_w"], params["att_con_out_b"])

    def stack(name, dtype):
        return jnp.asarray(np.stack([fv[name], fc[name]]), dtype)

    # constant masks (no iotas inside the kernel)
    rows = np.arange(CH) % num_heads
    cols = np.arange(E) // dh
    head_mask = (rows[:, None] == cols[None, :]).astype(np.float32)       # (CH, E)
    row_cls = (np.arange(CH) // num_heads).astype(np.int32).reshape(CH, 1)

    return {
        "w_node": stack("w_node", jnp.bfloat16),
        "b_node": stack("b_node", jnp.float32),
        "w_q": stack("w_q", jnp.bfloat16),
        "b_q": stack("b_q", jnp.float32),
        "w_o": stack("w_o", jnp.bfloat16),
        "b_o": stack("b_o", jnp.float32),
        "gamma": jnp.asarray(np.asarray(params["norm_w"]).reshape(1, E), jnp.float32),
        "beta": jnp.asarray(np.asarray(params["norm_b"]).reshape(1, E), jnp.float32),
        "head_mask": jnp.asarray(head_mask),
        "row_cls": jnp.asarray(row_cls),
        "col_cls": jnp.asarray(row_cls.reshape(1, CH)),
    }


# ---------------------------------------------------------------------------
# Per-call forward: minimal input padding/stacking + one pallas_call.
# ---------------------------------------------------------------------------
@functools.partial(jax.jit, static_argnames=("num_heads",))
def anchor1_forward(packed, v, c, v_sem, c_sem, v_class, c_class, num_heads=4):
    E = packed["gamma"].shape[1]
    CH = packed["head_mask"].shape[0]
    c_pad = CH // num_heads
    nv, nc = v.shape[0], c.shape[0]
    n_pad = _round_up(max(nv, nc), 16)          # bf16 packs 16 sublanes / vreg

    # runtime-input packing (the only per-call wrapper work)
    x = jnp.stack([_pad_rows(v, n_pad), _pad_rows(c, n_pad)]).astype(jnp.bfloat16)
    sem = jnp.stack([
        jnp.repeat(_pad_rows(v_sem, c_pad), num_heads, axis=0),
        jnp.repeat(_pad_rows(c_sem, c_pad), num_heads, axis=0),
    ]).astype(jnp.bfloat16)                                               # (2, CH, E)

    def cls_pad(ids, n):
        return jnp.pad(ids.astype(jnp.int32), (0, n_pad - n), constant_values=-1)

    cls = jnp.stack([cls_pad(v_class, nv), cls_pad(c_class, nc)])         # (2, n_pad)
    cls_row = cls.reshape(2, 1, n_pad)
    cls_col = cls.reshape(2, n_pad, 1)

    branch_args = [x, sem, cls_row, cls_col,
                   packed["w_node"], packed["b_node"],
                   packed["w_q"], packed["b_q"],
                   packed["w_o"], packed["b_o"]]
    shared_args = [packed["gamma"], packed["beta"],
                   packed["head_mask"], packed["row_cls"], packed["col_cls"]]

    if _two_tensorcore_chip():
        # one branch per grid step, split across the two TensorCores
        B, grid, dims = 1, (2,), ("parallel",)

        def branch_map(i):
            return (i, 0, 0)
    else:
        # single grid step processing both branches (avoids per-step overhead
        # on 1-TensorCore v5e / v6e chips)
        B, grid, dims = 2, (1,), ("arbitrary",)

        def branch_map(i):
            return (0, 0, 0)

    def shared_map(i):
        return (0, 0)

    in_specs = ([pl.BlockSpec((B,) + a.shape[1:], branch_map) for a in branch_args]
                + [pl.BlockSpec(a.shape, shared_map) for a in shared_args])
    out_specs = pl.BlockSpec((B, n_pad, E), branch_map)

    flops_branch = 2 * (n_pad * E * 3 * E      # node projection
                        + CH * E * E           # q projection
                        + CH * n_pad * E       # scores
                        + CH * n_pad * E       # PV
                        + CH * E * E           # out projection
                        + n_pad * CH * E)      # head-collapse + scatter
    cost = pl.CostEstimate(
        flops=2 * flops_branch,
        transcendentals=2 * CH * n_pad,
        bytes_accessed=int(sum(int(a.size) * a.dtype.itemsize
                               for a in branch_args + shared_args)
                           + 2 * n_pad * E * 4))

    kernel = functools.partial(_anchor_kernel, B, num_heads, E // num_heads)
    out = pl.pallas_call(
        kernel,
        out_shape=jax.ShapeDtypeStruct((2, n_pad, E), jnp.float32),
        grid=grid,
        in_specs=in_specs,
        out_specs=out_specs,
        compiler_params=pltpu.CompilerParams(dimension_semantics=dims),
        cost_estimate=cost,
    )(*branch_args, *shared_args)
    return out[0, :nv], out[1, :nc]


# ---------------------------------------------------------------------------
# float64 numpy reference (mirrors the PyTorch per-class loops exactly)
# ---------------------------------------------------------------------------
def _ref_branch(x, sem, cls_ids, send_w, send_b, in_w, in_b, out_w, out_b,
                nw, nb, num_heads=4):
    x = np.asarray(x, np.float64); sem = np.asarray(sem, np.float64)
    send_w = np.asarray(send_w, np.float64); send_b = np.asarray(send_b, np.float64)
    in_w = np.asarray(in_w, np.float64); in_b = np.asarray(in_b, np.float64)
    out_w = np.asarray(out_w, np.float64); out_b = np.asarray(out_b, np.float64)
    nw = np.asarray(nw, np.float64); nb = np.asarray(nb, np.float64)
    cls = np.asarray(cls_ids)
    N, E = x.shape
    C = sem.shape[0]
    dh = E // num_heads
    xs = x @ send_w.T + send_b
    wq, wk, wv = in_w[:E], in_w[E:2 * E], in_w[2 * E:]
    bq, bk, bv = in_b[:E], in_b[E:2 * E], in_b[2 * E:]
    out = np.zeros_like(xs)
    for i in range(C):
        idx = np.nonzero(cls == i)[0]
        if len(idx) == 0:
            continue
        feat = xs[idx]                                    # (L, E)
        q = sem[i:i + 1] @ wq.T + bq                      # (1, E)
        k = feat @ wk.T + bk
        vv = feat @ wv.T + bv
        heads = []
        for h in range(num_heads):
            qh = q[:, h * dh:(h + 1) * dh] / math.sqrt(dh)
            sc = qh @ k[:, h * dh:(h + 1) * dh].T
            e = np.exp(sc - sc.max(axis=-1, keepdims=True))
            p = e / e.sum(axis=-1, keepdims=True)
            heads.append(p @ vv[:, h * dh:(h + 1) * dh])
        a = np.concatenate(heads, axis=-1) @ out_w.T + out_b   # (1, E)
        prod = feat * a
        mean = prod.mean(-1, keepdims=True)
        var = ((prod - mean) ** 2).mean(-1, keepdims=True)
        out[idx] = (prod - mean) / np.sqrt(var + 1e-5) * nw + nb
    return out


if __name__ == "__main__":
    E = 32          # emb_size (divisible by num_heads=4)
    V_N, C_N = 3, 4
    NV, NC = 16, 12

    key = jax.random.PRNGKey(0)
    ks = jax.random.split(key, 20)

    v = jax.random.normal(ks[0], (NV, E), jnp.float32)
    c = jax.random.normal(ks[1], (NC, E), jnp.float32)
    v_sem = jax.random.normal(ks[2], (V_N, E), jnp.float32)
    c_sem = jax.random.normal(ks[3], (C_N, E), jnp.float32)
    v_class = jax.random.randint(ks[4], (NV,), 0, V_N)
    c_class = jax.random.randint(ks[5], (NC,), 0, C_N)

    def lin(k, out_dim, in_dim):
        return 0.1 * jax.random.normal(k, (out_dim, in_dim), jnp.float32)

    params = {
        "send_var_w": lin(ks[6], E, E),
        "send_var_b": 0.1 * jax.random.normal(ks[7], (E,), jnp.float32),
        "send_con_w": lin(ks[8], E, E),
        "send_con_b": 0.1 * jax.random.normal(ks[9], (E,), jnp.float32),
        "att_var_in_w": lin(ks[10], 3 * E, E),
        "att_var_in_b": 0.1 * jax.random.normal(ks[11], (3 * E,), jnp.float32),
        "att_var_out_w": lin(ks[12], E, E),
        "att_var_out_b": 0.1 * jax.random.normal(ks[13], (E,), jnp.float32),
        "att_con_in_w": lin(ks[14], 3 * E, E),
        "att_con_in_b": 0.1 * jax.random.normal(ks[15], (3 * E,), jnp.float32),
        "att_con_out_w": lin(ks[16], E, E),
        "att_con_out_b": 0.1 * jax.random.normal(ks[17], (E,), jnp.float32),
        "norm_w": 1.0 + 0.1 * jax.random.normal(ks[18], (E,), jnp.float32),
        "norm_b": 0.1 * jax.random.normal(ks[19], (E,), jnp.float32),
    }

    # one-time weight packing (outside the per-call forward path)
    packed = prepare_anchor1_params(params, v_n=V_N, c_n=C_N, emb_size=E, num_heads=4)

    v_upd, c_upd = anchor1_forward(packed, v, c, v_sem, c_sem, v_class, c_class,
                                   num_heads=4)
    jax.block_until_ready((v_upd, c_upd))

    v_ref = _ref_branch(v, v_sem, v_class,
                        params["send_var_w"], params["send_var_b"],
                        params["att_var_in_w"], params["att_var_in_b"],
                        params["att_var_out_w"], params["att_var_out_b"],
                        params["norm_w"], params["norm_b"])
    c_ref = _ref_branch(c, c_sem, c_class,
                        params["send_con_w"], params["send_con_b"],
                        params["att_con_in_w"], params["att_con_in_b"],
                        params["att_con_out_w"], params["att_con_out_b"],
                        params["norm_w"], params["norm_b"])

    assert v_upd.shape == (NV, E) and c_upd.shape == (NC, E)
    assert bool(jnp.all(jnp.isfinite(v_upd))) and bool(jnp.all(jnp.isfinite(c_upd)))
    # bf16 MXU inputs (f32 accumulation) → loosened tolerance vs the f64 reference.
    np.testing.assert_allclose(np.asarray(v_upd), v_ref, atol=3e-2, rtol=3e-2)
    np.testing.assert_allclose(np.asarray(c_upd), c_ref, atol=3e-2, rtol=3e-2)

    print("KERNEL_OK")
</pallas_src>

<mosaic_0001>
module attributes {stable_mosaic.version = 11 : i64} {
  func.func @_anchor_kernel(%arg0: i32, %arg1: memref<2x16x32xbf16, #tpu.memory_space<vmem>>, %arg2: memref<2x32x32xbf16, #tpu.memory_space<vmem>>, %arg3: memref<2x1x16xi32, #tpu.memory_space<vmem>>, %arg4: memref<2x16x1xi32, #tpu.memory_space<vmem>>, %arg5: memref<2x32x96xbf16, #tpu.memory_space<vmem>>, %arg6: memref<2x1x96xf32, #tpu.memory_space<vmem>>, %arg7: memref<2x32x32xbf16, #tpu.memory_space<vmem>>, %arg8: memref<2x1x32xf32, #tpu.memory_space<vmem>>, %arg9: memref<2x32x32xbf16, #tpu.memory_space<vmem>>, %arg10: memref<2x1x32xf32, #tpu.memory_space<vmem>>, %arg11: memref<1x32xf32, #tpu.memory_space<vmem>>, %arg12: memref<1x32xf32, #tpu.memory_space<vmem>>, %arg13: memref<32x32xf32, #tpu.memory_space<vmem>>, %arg14: memref<32x1xi32, #tpu.memory_space<vmem>>, %arg15: memref<1x32xi32, #tpu.memory_space<vmem>>, %arg16: memref<2x16x32xf32, #tpu.memory_space<vmem>>) attributes {dimension_semantics = [#tpu.dimension_semantics<arbitrary>], iteration_bounds = array<i64: 1>, scalar_prefetch = 0 : i64, scratch_operands = 0 : i64, tpu.core_type = #tpu.core_type<tc>, window_params = [{pipeline_mode = #tpu.pipeline_mode<synchronous>, transform_indices = @transform_0, window_bounds = array<i64: 2, 16, 32>}, {pipeline_mode = #tpu.pipeline_mode<synchronous>, transform_indices = @transform_1, window_bounds = array<i64: 2, 32, 32>}, {pipeline_mode = #tpu.pipeline_mode<synchronous>, transform_indices = @transform_2, window_bounds = array<i64: 2, 1, 16>}, {pipeline_mode = #tpu.pipeline_mode<synchronous>, transform_indices = @transform_3, window_bounds = array<i64: 2, 16, 1>}, {pipeline_mode = #tpu.pipeline_mode<synchronous>, transform_indices = @transform_4, window_bounds = array<i64: 2, 32, 96>}, {pipeline_mode = #tpu.pipeline_mode<synchronous>, transform_indices = @transform_5, window_bounds = array<i64: 2, 1, 96>}, {pipeline_mode = #tpu.pipeline_mode<synchronous>, transform_indices = @transform_6, window_bounds = array<i64: 2, 32, 32>}, {pipeline_mode = #tpu.pipeline_mode<synchronous>, transform_indices = @transform_7, window_bounds = array<i64: 2, 1, 32>}, {pipeline_mode = #tpu.pipeline_mode<synchronous>, transform_indices = @transform_8, window_bounds = array<i64: 2, 32, 32>}, {pipeline_mode = #tpu.pipeline_mode<synchronous>, transform_indices = @transform_9, window_bounds = array<i64: 2, 1, 32>}, {pipeline_mode = #tpu.pipeline_mode<synchronous>, transform_indices = @transform_10, window_bounds = array<i64: 1, 32>}, {pipeline_mode = #tpu.pipeline_mode<synchronous>, transform_indices = @transform_11, window_bounds = array<i64: 1, 32>}, {pipeline_mode = #tpu.pipeline_mode<synchronous>, transform_indices = @transform_12, window_bounds = array<i64: 32, 32>}, {pipeline_mode = #tpu.pipeline_mode<synchronous>, transform_indices = @transform_13, window_bounds = array<i64: 32, 1>}, {pipeline_mode = #tpu.pipeline_mode<synchronous>, transform_indices = @transform_14, window_bounds = array<i64: 1, 32>}, {pipeline_mode = #tpu.pipeline_mode<synchronous>, transform_indices = @transform_15, window_bounds = array<i64: 2, 16, 32>}]} {
    %c0 = arith.constant 0 : index
    %c0_0 = arith.constant 0 : index
    %0 = vector.load %arg11[%c0, %c0_0] : memref<1x32xf32, #tpu.memory_space<vmem>>, vector<1x32xf32>
    %c0_1 = arith.constant 0 : index
    %c0_2 = arith.constant 0 : index
    %1 = vector.load %arg12[%c0_1, %c0_2] : memref<1x32xf32, #tpu.memory_space<vmem>>, vector<1x32xf32>
    %c0_3 = arith.constant 0 : index
    %c0_4 = arith.constant 0 : index
    %2 = vector.load %arg13[%c0_3, %c0_4] : memref<32x32xf32, #tpu.memory_space<vmem>>, vector<32x32xf32>
    %c0_5 = arith.constant 0 : index
    %c0_6 = arith.constant 0 : index
    %3 = vector.load %arg14[%c0_5, %c0_6] : memref<32x1xi32, #tpu.memory_space<vmem>>, vector<32x1xi32>
    %c0_7 = arith.constant 0 : index
    %c0_8 = arith.constant 0 : index
    %4 = vector.load %arg15[%c0_7, %c0_8] : memref<1x32xi32, #tpu.memory_space<vmem>>, vector<1x32xi32>
    %c0_9 = arith.constant 0 : index
    %c0_10 = arith.constant 0 : index
    %c0_11 = arith.constant 0 : index
    %5 = vector.load %arg1[%c0_9, %c0_10, %c0_11] : memref<2x16x32xbf16, #tpu.memory_space<vmem>>, vector<1x16x32xbf16>
    %6 = vector.shape_cast %5 : vector<1x16x32xbf16> to vector<16x32xbf16>
    %c0_12 = arith.constant 0 : index
    %c0_13 = arith.constant 0 : index
    %c0_14 = arith.constant 0 : index
    %7 = vector.load %arg3[%c0_12, %c0_13, %c0_14] : memref<2x1x16xi32, #tpu.memory_space<vmem>>, vector<1x1x16xi32>
    %8 = vector.shape_cast %7 : vector<1x1x16xi32> to vector<1x16xi32>
    %c0_15 = arith.constant 0 : index
    %c0_16 = arith.constant 0 : index
    %c0_17 = arith.constant 0 : index
    %9 = vector.load %arg4[%c0_15, %c0_16, %c0_17] : memref<2x16x1xi32, #tpu.memory_space<vmem>>, vector<1x16x1xi32>
    %10 = vector.shape_cast %9 : vector<1x16x1xi32> to vector<16x1xi32>
    %c0_18 = arith.constant 0 : index
    %c0_19 = arith.constant 0 : index
    %c0_20 = arith.constant 0 : index
    %11 = vector.load %arg5[%c0_18, %c0_19, %c0_20] : memref<2x32x96xbf16, #tpu.memory_space<vmem>>, vector<1x32x96xbf16>
    %12 = vector.shape_cast %11 : vector<1x32x96xbf16> to vector<32x96xbf16>
    %cst = arith.constant dense<0.000000e+00> : vector<16x96xf32>
    %13 = tpu.matmul %6, %12, %cst {dimension_numbers = #tpu.dot_dimension_numbers<[1], [0], [0], [1], [0, 0, 1, 1], [], []>} : vector<16x32xbf16>, vector<32x96xbf16>, vector<16x96xf32> -> vector<16x96xf32>
    %c0_21 = arith.constant 0 : index
    %c0_22 = arith.constant 0 : index
    %c0_23 = arith.constant 0 : index
    %14 = vector.load %arg6[%c0_21, %c0_22, %c0_23] : memref<2x1x96xf32, #tpu.memory_space<vmem>>, vector<1x1x96xf32>
    %15 = vector.shape_cast %14 : vector<1x1x96xf32> to vector<1x96xf32>
    %16 = vector.broadcast %15 : vector<1x96xf32> to vector<16x96xf32>
    %17 = arith.addf %13, %16 : vector<16x96xf32>
    %18 = vector.extract_strided_slice %17 {offsets = [0, 0], sizes = [16, 32], strides = [1, 1]} : vector<16x96xf32> to vector<16x32xf32>
    %19 = vector.extract_strided_slice %17 {offsets = [0, 32], sizes = [16, 32], strides = [1, 1]} : vector<16x96xf32> to vector<16x32xf32>
    %20 = arith.truncf %19 : vector<16x32xf32> to vector<16x32xbf16>
    %21 = vector.extract_strided_slice %17 {offsets = [0, 64], sizes = [16, 32], strides = [1, 1]} : vector<16x96xf32> to vector<16x32xf32>
    %22 = arith.truncf %21 : vector<16x32xf32> to vector<16x32xbf16>
    %c0_24 = arith.constant 0 : index
    %c0_25 = arith.constant 0 : index
    %c0_26 = arith.constant 0 : index
    %23 = vector.load %arg2[%c0_24, %c0_25, %c0_26] : memref<2x32x32xbf16, #tpu.memory_space<vmem>>, vector<1x32x32xbf16>
    %24 = vector.shape_cast %23 : vector<1x32x32xbf16> to vector<32x32xbf16>
    %c0_27 = arith.constant 0 : index
    %c0_28 = arith.constant 0 : index
    %c0_29 = arith.constant 0 : index
    %25 = vector.load %arg7[%c0_27, %c0_28, %c0_29] : memref<2x32x32xbf16, #tpu.memory_space<vmem>>, vector<1x32x32xbf16>
    %26 = vector.shape_cast %25 : vector<1x32x32xbf16> to vector<32x32xbf16>
    %cst_30 = arith.constant dense<0.000000e+00> : vector<32x32xf32>
    %27 = tpu.matmul %24, %26, %cst_30 {dimension_numbers = #tpu.dot_dimension_numbers<[1], [0], [0], [1], [0, 0, 1, 1], [], []>} : vector<32x32xbf16>, vector<32x32xbf16>, vector<32x32xf32> -> vector<32x32xf32>
    %c0_31 = arith.constant 0 : index
    %c0_32 = arith.constant 0 : index
    %c0_33 = arith.constant 0 : index
    %28 = vector.load %arg8[%c0_31, %c0_32, %c0_33] : memref<2x1x32xf32, #tpu.memory_space<vmem>>, vector<1x1x32xf32>
    %29 = vector.shape_cast %28 : vector<1x1x32xf32> to vector<1x32xf32>
    %30 = vector.broadcast %29 : vector<1x32xf32> to vector<32x32xf32>
    %31 = arith.addf %27, %30 : vector<32x32xf32>
    %32 = arith.mulf %31, %2 : vector<32x32xf32>
    %33 = arith.truncf %32 : vector<32x32xf32> to vector<32x32xbf16>
    %cst_34 = arith.constant dense<0.000000e+00> : vector<32x16xf32>
    %34 = tpu.matmul %33, %20, %cst_34 {dimension_numbers = #tpu.dot_dimension_numbers<[1], [1], [0], [0], [0, 0, 1, 0], [], []>} : vector<32x32xbf16>, vector<16x32xbf16>, vector<32x16xf32> -> vector<32x16xf32>
    %35 = vector.broadcast %3 : vector<32x1xi32> to vector<32x16xi32>
    %36 = vector.broadcast %8 : vector<1x16xi32> to vector<32x16xi32>
    %37 = arith.cmpi eq, %35, %36 : vector<32x16xi32>
    %38 = arith.extui %37 : vector<32x16xi1> to vector<32x16xi32>
    %39 = arith.sitofp %38 : vector<32x16xi32> to vector<32x16xf32>
    %cst_35 = arith.constant -1.000000e+30 : f32
    %40 = vector.broadcast %cst_35 : f32 to vector<32x16xf32>
    %41 = arith.select %37, %34, %40 : vector<32x16xi1>, vector<32x16xf32>
    %cst_36 = arith.constant dense<0xFF800000> : vector<32xf32>
    %42 = vector.multi_reduction <maximumf>, %41, %cst_36 [1] : vector<32x16xf32> to vector<32xf32>
    %43 = vector.shape_cast %42 : vector<32xf32> to vector<32x1xf32>
    %44 = vector.broadcast %43 : vector<32x1xf32> to vector<32x16xf32>
    %45 = arith.subf %41, %44 : vector<32x16xf32>
    %46 = math.exp %45 : vector<32x16xf32>
    %47 = arith.mulf %46, %39 : vector<32x16xf32>
    %cst_37 = arith.constant dense<0.000000e+00> : vector<32xf32>
    %48 = vector.multi_reduction <add>, %47, %cst_37 [1] : vector<32x16xf32> to vector<32xf32>
    %49 = vector.shape_cast %48 : vector<32xf32> to vector<32x1xf32>
    %cst_38 = arith.constant 0.000000e+00 : f32
    %50 = vector.broadcast %cst_38 : f32 to vector<32x1xf32>
    %51 = arith.cmpf ogt, %49, %50 : vector<32x1xf32>
    %cst_39 = arith.constant 1.000000e+00 : f32
    %52 = vector.broadcast %cst_39 : f32 to vector<32x1xf32>
    %53 = arith.select %51, %49, %52 : vector<32x1xi1>, vector<32x1xf32>
    %54 = tpu.reciprocal %53 {approx = true} : vector<32x1xf32> -> vector<32x1xf32>
    %55 = arith.truncf %47 : vector<32x16xf32> to vector<32x16xbf16>
    %cst_40 = arith.constant dense<0.000000e+00> : vector<32x32xf32>
    %56 = tpu.matmul %55, %22, %cst_40 {dimension_numbers = #tpu.dot_dimension_numbers<[1], [0], [0], [1], [0, 0, 1, 1], [], []>} : vector<32x16xbf16>, vector<16x32xbf16>, vector<32x32xf32> -> vector<32x32xf32>
    %57 = vector.broadcast %54 : vector<32x1xf32> to vector<32x32xf32>
    %58 = arith.mulf %56, %57 : vector<32x32xf32>
    %59 = arith.mulf %58, %2 : vector<32x32xf32>
    %60 = arith.truncf %59 : vector<32x32xf32> to vector<32x32xbf16>
    %c0_41 = arith.constant 0 : index
    %c0_42 = arith.constant 0 : index
    %c0_43 = arith.constant 0 : index
    %61 = vector.load %arg9[%c0_41, %c0_42, %c0_43] : memref<2x32x32xbf16, #tpu.memory_space<vmem>>, vector<1x32x32xbf16>
    %62 = vector.shape_cast %61 : vector<1x32x32xbf16> to vector<32x32xbf16>
    %cst_44 = arith.constant dense<0.000000e+00> : vector<32x32xf32>
    %63 = tpu.matmul %60, %62, %cst_44 {dimension_numbers = #tpu.dot_dimension_numbers<[1], [0], [0], [1], [0, 0, 1, 1], [], []>} : vector<32x32xbf16>, vector<32x32xbf16>, vector<32x32xf32> -> vector<32x32xf32>
    %64 = vector.broadcast %10 : vector<16x1xi32> to vector<16x32xi32>
    %65 = vector.broadcast %4 : vector<1x32xi32> to vector<16x32xi32>
    %66 = arith.cmpi eq, %64, %65 : vector<16x32xi32>
    %67 = arith.extui %66 : vector<16x32xi1> to vector<16x32xi32>
    %68 = arith.sitofp %67 : vector<16x32xi32> to vector<16x32xf32>
    %69 = arith.truncf %68 : vector<16x32xf32> to vector<16x32xbf16>
    %70 = arith.truncf %63 : vector<32x32xf32> to vector<32x32xbf16>
    %cst_45 = arith.constant dense<0.000000e+00> : vector<16x32xf32>
    %71 = tpu.matmul %69, %70, %cst_45 {dimension_numbers = #tpu.dot_dimension_numbers<[1], [0], [0], [1], [0, 0, 1, 1], [], []>} : vector<16x32xbf16>, vector<32x32xbf16>, vector<16x32xf32> -> vector<16x32xf32>
    %c0_46 = arith.constant 0 : index
    %c0_47 = arith.constant 0 : index
    %c0_48 = arith.constant 0 : index
    %72 = vector.load %arg10[%c0_46, %c0_47, %c0_48] : memref<2x1x32xf32, #tpu.memory_space<vmem>>, vector<1x1x32xf32>
    %73 = vector.shape_cast %72 : vector<1x1x32xf32> to vector<1x32xf32>
    %74 = vector.broadcast %73 : vector<1x32xf32> to vector<16x32xf32>
    %75 = arith.addf %71, %74 : vector<16x32xf32>
    %76 = arith.mulf %18, %75 : vector<16x32xf32>
    %cst_49 = arith.constant dense<0.000000e+00> : vector<16xf32>
    %77 = vector.multi_reduction <add>, %76, %cst_49 [1] : vector<16x32xf32> to vector<16xf32>
    %78 = vector.shape_cast %77 : vector<16xf32> to vector<16x1xf32>
    %cst_50 = arith.constant 3.200000e+01 : f32
    %79 = vector.broadcast %cst_50 : f32 to vector<16x1xf32>
    %80 = arith.divf %78, %79 : vector<16x1xf32>
    %81 = vector.broadcast %80 : vector<16x1xf32> to vector<16x32xf32>
    %82 = arith.subf %76, %81 : vector<16x32xf32>
    %83 = arith.mulf %82, %82 : vector<16x32xf32>
    %cst_51 = arith.constant dense<0.000000e+00> : vector<16xf32>
    %84 = vector.multi_reduction <add>, %83, %cst_51 [1] : vector<16x32xf32> to vector<16xf32>
    %85 = vector.shape_cast %84 : vector<16xf32> to vector<16x1xf32>
    %cst_52 = arith.constant 3.200000e+01 : f32
    %86 = vector.broadcast %cst_52 : f32 to vector<16x1xf32>
    %87 = arith.divf %85, %86 : vector<16x1xf32>
    %88 = vector.broadcast %80 : vector<16x1xf32> to vector<16x32xf32>
    %89 = arith.subf %76, %88 : vector<16x32xf32>
    %cst_53 = arith.constant 9.99999974E-6 : f32
    %90 = vector.broadcast %cst_53 : f32 to vector<16x1xf32>
    %91 = arith.addf %87, %90 : vector<16x1xf32>
    %92 = math.rsqrt %91 : vector<16x1xf32>
    %93 = vector.broadcast %92 : vector<16x1xf32> to vector<16x32xf32>
    %94 = arith.mulf %89, %93 : vector<16x32xf32>
    %95 = vector.broadcast %0 : vector<1x32xf32> to vector<16x32xf32>
    %96 = arith.mulf %94, %95 : vector<16x32xf32>
    %97 = vector.broadcast %1 : vector<1x32xf32> to vector<16x32xf32>
    %98 = arith.addf %96, %97 : vector<16x32xf32>
    %c0_54 = arith.constant 0 : index
    %c0_55 = arith.constant 0 : index
    %c0_56 = arith.constant 0 : index
    %99 = vector.load %arg16[%c0_54, %c0_55, %c0_56] : memref<2x16x32xf32, #tpu.memory_space<vmem>>, vector<1x16x32xf32>
    %100 = vector.shape_cast %99 : vector<1x16x32xf32> to vector<16x32xf32>
    %101 = vector.shape_cast %98 : vector<16x32xf32> to vector<1x16x32xf32>
    tpu.vector_store %arg16[%c0_54, %c0_55, %c0_56], %101 {strides = array<i32>} : memref<2x16x32xf32, #tpu.memory_space<vmem>>, vector<1x16x32xf32>,
    %c1 = arith.constant 1 : index
    %c0_57 = arith.constant 0 : index
    %c0_58 = arith.constant 0 : index
    %102 = vector.load %arg1[%c1, %c0_57, %c0_58] : memref<2x16x32xbf16, #tpu.memory_space<vmem>>, vector<1x16x32xbf16>
    %103 = vector.shape_cast %102 : vector<1x16x32xbf16> to vector<16x32xbf16>
    %c1_59 = arith.constant 1 : index
    %c0_60 = arith.constant 0 : index
    %c0_61 = arith.constant 0 : index
    %104 = vector.load %arg3[%c1_59, %c0_60, %c0_61] : memref<2x1x16xi32, #tpu.memory_space<vmem>>, vector<1x1x16xi32>
    %105 = vector.shape_cast %104 : vector<1x1x16xi32> to vector<1x16xi32>
    %c1_62 = arith.constant 1 : index
    %c0_63 = arith.constant 0 : index
    %c0_64 = arith.constant 0 : index
    %106 = vector.load %arg4[%c1_62, %c0_63, %c0_64] : memref<2x16x1xi32, #tpu.memory_space<vmem>>, vector<1x16x1xi32>
    %107 = vector.shape_cast %106 : vector<1x16x1xi32> to vector<16x1xi32>
    %c1_65 = arith.constant 1 : index
    %c0_66 = arith.constant 0 : index
    %c0_67 = arith.constant 0 : index
    %108 = vector.load %arg5[%c1_65, %c0_66, %c0_67] : memref<2x32x96xbf16, #tpu.memory_space<vmem>>, vector<1x32x96xbf16>
    %109 = vector.shape_cast %108 : vector<1x32x96xbf16> to vector<32x96xbf16>
    %cst_68 = arith.constant dense<0.000000e+00> : vector<16x96xf32>
    %110 = tpu.matmul %103, %109, %cst_68 {dimension_numbers = #tpu.dot_dimension_numbers<[1], [0], [0], [1], [0, 0, 1, 1], [], []>} : vector<16x32xbf16>, vector<32x96xbf16>, vector<16x96xf32> -> vector<16x96xf32>
    %c1_69 = arith.constant 1 : index
    %c0_70 = arith.constant 0 : index
    %c0_71 = arith.constant 0 : index
    %111 = vector.load %arg6[%c1_69, %c0_70, %c0_71] : memref<2x1x96xf32, #tpu.memory_space<vmem>>, vector<1x1x96xf32>
    %112 = vector.shape_cast %111 : vector<1x1x96xf32> to vector<1x96xf32>
    %113 = vector.broadcast %112 : vector<1x96xf32> to vector<16x96xf32>
    %114 = arith.addf %110, %113 : vector<16x96xf32>
    %115 = vector.extract_strided_slice %114 {offsets = [0, 0], sizes = [16, 32], strides = [1, 1]} : vector<16x96xf32> to vector<16x32xf32>
    %116 = vector.extract_strided_slice %114 {offsets = [0, 32], sizes = [16, 32], strides = [1, 1]} : vector<16x96xf32> to vector<16x32xf32>
    %117 = arith.truncf %116 : vector<16x32xf32> to vector<16x32xbf16>
    %118 = vector.extract_strided_slice %114 {offsets = [0, 64], sizes = [16, 32], strides = [1, 1]} : vector<16x96xf32> to vector<16x32xf32>
    %119 = arith.truncf %118 : vector<16x32xf32> to vector<16x32xbf16>
    %c1_72 = arith.constant 1 : index
    %c0_73 = arith.constant 0 : index
    %c0_74 = arith.constant 0 : index
    %120 = vector.load %arg2[%c1_72, %c0_73, %c0_74] : memref<2x32x32xbf16, #tpu.memory_space<vmem>>, vector<1x32x32xbf16>
    %121 = vector.shape_cast %120 : vector<1x32x32xbf16> to vector<32x32xbf16>
    %c1_75 = arith.constant 1 : index
    %c0_76 = arith.constant 0 : index
    %c0_77 = arith.constant 0 : index
    %122 = vector.load %arg7[%c1_75, %c0_76, %c0_77] : memref<2x32x32xbf16, #tpu.memory_space<vmem>>, vector<1x32x32xbf16>
    %123 = vector.shape_cast %122 : vector<1x32x32xbf16> to vector<32x32xbf16>
    %cst_78 = arith.constant dense<0.000000e+00> : vector<32x32xf32>
    %124 = tpu.matmul %121, %123, %cst_78 {dimension_numbers = #tpu.dot_dimension_numbers<[1], [0], [0], [1], [0, 0, 1, 1], [], []>} : vector<32x32xbf16>, vector<32x32xbf16>, vector<32x32xf32> -> vector<32x32xf32>
    %c1_79 = arith.constant 1 : index
    %c0_80 = arith.constant 0 : index
    %c0_81 = arith.constant 0 : index
    %125 = vector.load %arg8[%c1_79, %c0_80, %c0_81] : memref<2x1x32xf32, #tpu.memory_space<vmem>>, vector<1x1x32xf32>
    %126 = vector.shape_cast %125 : vector<1x1x32xf32> to vector<1x32xf32>
    %127 = vector.broadcast %126 : vector<1x32xf32> to vector<32x32xf32>
    %128 = arith.addf %124, %127 : vector<32x32xf32>
    %129 = arith.mulf %128, %2 : vector<32x32xf32>
    %130 = arith.truncf %129 : vector<32x32xf32> to vector<32x32xbf16>
    %cst_82 = arith.constant dense<0.000000e+00> : vector<32x16xf32>
    %131 = tpu.matmul %130, %117, %cst_82 {dimension_numbers = #tpu.dot_dimension_numbers<[1], [1], [0], [0], [0, 0, 1, 0], [], []>} : vector<32x32xbf16>, vector<16x32xbf16>, vector<32x16xf32> -> vector<32x16xf32>
    %132 = vector.broadcast %3 : vector<32x1xi32> to vector<32x16xi32>
    %133 = vector.broadcast %105 : vector<1x16xi32> to vector<32x16xi32>
    %134 = arith.cmpi eq, %132, %133 : vector<32x16xi32>
    %135 = arith.extui %134 : vector<32x16xi1> to vector<32x16xi32>
    %136 = arith.sitofp %135 : vector<32x16xi32> to vector<32x16xf32>
    %cst_83 = arith.constant -1.000000e+30 : f32
    %137 = vector.broadcast %cst_83 : f32 to vector<32x16xf32>
    %138 = arith.select %134, %131, %137 : vector<32x16xi1>, vector<32x16xf32>
    %cst_84 = arith.constant dense<0xFF800000> : vector<32xf32>
    %139 = vector.multi_reduction <maximumf>, %138, %cst_84 [1] : vector<32x16xf32> to vector<32xf32>
    %140 = vector.shape_cast %139 : vector<32xf32> to vector<32x1xf32>
    %141 = vector.broadcast %140 : vector<32x1xf32> to vector<32x16xf32>
    %142 = arith.subf %138, %141 : vector<32x16xf32>
    %143 = math.exp %142 : vector<32x16xf32>
    %144 = arith.mulf %143, %136 : vector<32x16xf32>
    %cst_85 = arith.constant dense<0.000000e+00> : vector<32xf32>
    %145 = vector.multi_reduction <add>, %144, %cst_85 [1] : vector<32x16xf32> to vector<32xf32>
    %146 = vector.shape_cast %145 : vector<32xf32> to vector<32x1xf32>
    %cst_86 = arith.constant 0.000000e+00 : f32
    %147 = vector.broadcast %cst_86 : f32 to vector<32x1xf32>
    %148 = arith.cmpf ogt, %146, %147 : vector<32x1xf32>
    %cst_87 = arith.constant 1.000000e+00 : f32
    %149 = vector.broadcast %cst_87 : f32 to vector<32x1xf32>
    %150 = arith.select %148, %146, %149 : vector<32x1xi1>, vector<32x1xf32>
    %151 = tpu.reciprocal %150 {approx = true} : vector<32x1xf32> -> vector<32x1xf32>
    %152 = arith.truncf %144 : vector<32x16xf32> to vector<32x16xbf16>
    %cst_88 = arith.constant dense<0.000000e+00> : vector<32x32xf32>
    %153 = tpu.matmul %152, %119, %cst_88 {dimension_numbers = #tpu.dot_dimension_numbers<[1], [0], [0], [1], [0, 0, 1, 1], [], []>} : vector<32x16xbf16>, vector<16x32xbf16>, vector<32x32xf32> -> vector<32x32xf32>
    %154 = vector.broadcast %151 : vector<32x1xf32> to vector<32x32xf32>
    %155 = arith.mulf %153, %154 : vector<32x32xf32>
    %156 = arith.mulf %155, %2 : vector<32x32xf32>
    %157 = arith.truncf %156 : vector<32x32xf32> to vector<32x32xbf16>
    %c1_89 = arith.constant 1 : index
    %c0_90 = arith.constant 0 : index
    %c0_91 = arith.constant 0 : index
    %158 = vector.load %arg9[%c1_89, %c0_90, %c0_91] : memref<2x32x32xbf16, #tpu.memory_space<vmem>>, vector<1x32x32xbf16>
    %159 = vector.shape_cast %158 : vector<1x32x32xbf16> to vector<32x32xbf16>
    %cst_92 = arith.constant dense<0.000000e+00> : vector<32x32xf32>
    %160 = tpu.matmul %157, %159, %cst_92 {dimension_numbers = #tpu.dot_dimension_numbers<[1], [0], [0], [1], [0, 0, 1, 1], [], []>} : vector<32x32xbf16>, vector<32x32xbf16>, vector<32x32xf32> -> vector<32x32xf32>
    %161 = vector.broadcast %107 : vector<16x1xi32> to vector<16x32xi32>
    %162 = vector.broadcast %4 : vector<1x32xi32> to vector<16x32xi32>
    %163 = arith.cmpi eq, %161, %162 : vector<16x32xi32>
    %164 = arith.extui %163 : vector<16x32xi1> to vector<16x32xi32>
    %165 = arith.sitofp %164 : vector<16x32xi32> to vector<16x32xf32>
    %166 = arith.truncf %165 : vector<16x32xf32> to vector<16x32xbf16>
    %167 = arith.truncf %160 : vector<32x32xf32> to vector<32x32xbf16>
    %cst_93 = arith.constant dense<0.000000e+00> : vector<16x32xf32>
    %168 = tpu.matmul %166, %167, %cst_93 {dimension_numbers = #tpu.dot_dimension_numbers<[1], [0], [0], [1], [0, 0, 1, 1], [], []>} : vector<16x32xbf16>, vector<32x32xbf16>, vector<16x32xf32> -> vector<16x32xf32>
    %c1_94 = arith.constant 1 : index
    %c0_95 = arith.constant 0 : index
    %c0_96 = arith.constant 0 : index
    %169 = vector.load %arg10[%c1_94, %c0_95, %c0_96] : memref<2x1x32xf32, #tpu.memory_space<vmem>>, vector<1x1x32xf32>
    %170 = vector.shape_cast %169 : vector<1x1x32xf32> to vector<1x32xf32>
    %171 = vector.broadcast %170 : vector<1x32xf32> to vector<16x32xf32>
    %172 = arith.addf %168, %171 : vector<16x32xf32>
    %173 = arith.mulf %115, %172 : vector<16x32xf32>
    %cst_97 = arith.constant dense<0.000000e+00> : vector<16xf32>
    %174 = vector.multi_reduction <add>, %173, %cst_97 [1] : vector<16x32xf32> to vector<16xf32>
    %175 = vector.shape_cast %174 : vector<16xf32> to vector<16x1xf32>
    %cst_98 = arith.constant 3.200000e+01 : f32
    %176 = vector.broadcast %cst_98 : f32 to vector<16x1xf32>
    %177 = arith.divf %175, %176 : vector<16x1xf32>
    %178 = vector.broadcast %177 : vector<16x1xf32> to vector<16x32xf32>
    %179 = arith.subf %173, %178 : vector<16x32xf32>
    %180 = arith.mulf %179, %179 : vector<16x32xf32>
    %cst_99 = arith.constant dense<0.000000e+00> : vector<16xf32>
    %181 = vector.multi_reduction <add>, %180, %cst_99 [1] : vector<16x32xf32> to vector<16xf32>
    %182 = vector.shape_cast %181 : vector<16xf32> to vector<16x1xf32>
    %cst_100 = arith.constant 3.200000e+01 : f32
    %183 = vector.broadcast %cst_100 : f32 to vector<16x1xf32>
    %184 = arith.divf %182, %183 : vector<16x1xf32>
    %185 = vector.broadcast %177 : vector<16x1xf32> to vector<16x32xf32>
    %186 = arith.subf %173, %185 : vector<16x32xf32>
    %cst_101 = arith.constant 9.99999974E-6 : f32
    %187 = vector.broadcast %cst_101 : f32 to vector<16x1xf32>
    %188 = arith.addf %184, %187 : vector<16x1xf32>
    %189 = math.rsqrt %188 : vector<16x1xf32>
    %190 = vector.broadcast %189 : vector<16x1xf32> to vector<16x32xf32>
    %191 = arith.mulf %186, %190 : vector<16x32xf32>
    %192 = vector.broadcast %0 : vector<1x32xf32> to vector<16x32xf32>
    %193 = arith.mulf %191, %192 : vector<16x32xf32>
    %194 = vector.broadcast %1 : vector<1x32xf32> to vector<16x32xf32>
    %195 = arith.addf %193, %194 : vector<16x32xf32>
    %c1_102 = arith.constant 1 : index
    %c0_103 = arith.constant 0 : index
    %c0_104 = arith.constant 0 : index
    %196 = vector.load %arg16[%c1_102, %c0_103, %c0_104] : memref<2x16x32xf32, #tpu.memory_space<vmem>>, vector<1x16x32xf32>
    %197 = vector.shape_cast %196 : vector<1x16x32xf32> to vector<16x32xf32>
    %198 = vector.shape_cast %195 : vector<16x32xf32> to vector<1x16x32xf32>
    tpu.vector_store %arg16[%c1_102, %c0_103, %c0_104], %198 {strides = array<i32>} : memref<2x16x32xf32, #tpu.memory_space<vmem>>, vector<1x16x32xf32>,
    return
  }
  func.func @transform_0(%arg0: i32) -> (i32, i32, i32) {
    %c0_i32 = arith.constant 0 : i32
    %c0_i32_0 = arith.constant 0 : i32
    %c0_i32_1 = arith.constant 0 : i32
    %c0_i32_2 = arith.constant 0 : i32
    return %c0_i32, %c0_i32_0, %c0_i32_1 : i32, i32, i32
  }
  func.func @transform_1(%arg0: i32) -> (i32, i32, i32) {
    %c0_i32 = arith.constant 0 : i32
    %c0_i32_0 = arith.constant 0 : i32
    %c0_i32_1 = arith.constant 0 : i32
    %c0_i32_2 = arith.constant 0 : i32
    return %c0_i32, %c0_i32_0, %c0_i32_1 : i32, i32, i32
  }
  func.func @transform_2(%arg0: i32) -> (i32, i32, i32) {
    %c0_i32 = arith.constant 0 : i32
    %c0_i32_0 = arith.constant 0 : i32
    %c0_i32_1 = arith.constant 0 : i32
    %c0_i32_2 = arith.constant 0 : i32
    return %c0_i32, %c0_i32_0, %c0_i32_1 : i32, i32, i32
  }
  func.func @transform_3(%arg0: i32) -> (i32, i32, i32) {
    %c0_i32 = arith.constant 0 : i32
    %c0_i32_0 = arith.constant 0 : i32
    %c0_i32_1 = arith.constant 0 : i32
    %c0_i32_2 = arith.constant 0 : i32
    return %c0_i32, %c0_i32_0, %c0_i32_1 : i32, i32, i32
  }
  func.func @transform_4(%arg0: i32) -> (i32, i32, i32) {
    %c0_i32 = arith.constant 0 : i32
    %c0_i32_0 = arith.constant 0 : i32
    %c0_i32_1 = arith.constant 0 : i32
    %c0_i32_2 = arith.constant 0 : i32
    return %c0_i32, %c0_i32_0, %c0_i32_1 : i32, i32, i32
  }
  func.func @transform_5(%arg0: i32) -> (i32, i32, i32) {
    %c0_i32 = arith.constant 0 : i32
    %c0_i32_0 = arith.constant 0 : i32
    %c0_i32_1 = arith.constant 0 : i32
    %c0_i32_2 = arith.constant 0 : i32
    return %c0_i32, %c0_i32_0, %c0_i32_1 : i32, i32, i32
  }
  func.func @transform_6(%arg0: i32) -> (i32, i32, i32) {
    %c0_i32 = arith.constant 0 : i32
    %c0_i32_0 = arith.constant 0 : i32
    %c0_i32_1 = arith.constant 0 : i32
    %c0_i32_2 = arith.constant 0 : i32
    return %c0_i32, %c0_i32_0, %c0_i32_1 : i32, i32, i32
  }
  func.func @transform_7(%arg0: i32) -> (i32, i32, i32) {
    %c0_i32 = arith.constant 0 : i32
    %c0_i32_0 = arith.constant 0 : i32
    %c0_i32_1 = arith.constant 0 : i32
    %c0_i32_2 = arith.constant 0 : i32
    return %c0_i32, %c0_i32_0, %c0_i32_1 : i32, i32, i32
  }
  func.func @transform_8(%arg0: i32) -> (i32, i32, i32) {
    %c0_i32 = arith.constant 0 : i32
    %c0_i32_0 = arith.constant 0 : i32
    %c0_i32_1 = arith.constant 0 : i32
    %c0_i32_2 = arith.constant 0 : i32
    return %c0_i32, %c0_i32_0, %c0_i32_1 : i32, i32, i32
  }
  func.func @transform_9(%arg0: i32) -> (i32, i32, i32) {
    %c0_i32 = arith.constant 0 : i32
    %c0_i32_0 = arith.constant 0 : i32
    %c0_i32_1 = arith.constant 0 : i32
    %c0_i32_2 = arith.constant 0 : i32
    return %c0_i32, %c0_i32_0, %c0_i32_1 : i32, i32, i32
  }
  func.func @transform_10(%arg0: i32) -> (i32, i32) {
    %c0_i32 = arith.constant 0 : i32
    %c0_i32_0 = arith.constant 0 : i32
    %c0_i32_1 = arith.constant 0 : i32
    return %c0_i32, %c0_i32_0 : i32, i32
  }
  func.func @transform_11(%arg0: i32) -> (i32, i32) {
    %c0_i32 = arith.constant 0 : i32
    %c0_i32_0 = arith.constant 0 : i32
    %c0_i32_1 = arith.constant 0 : i32
    return %c0_i32, %c0_i32_0 : i32, i32
  }
  func.func @transform_12(%arg0: i32) -> (i32, i32) {
    %c0_i32 = arith.constant 0 : i32
    %c0_i32_0 = arith.constant 0 : i32
    %c0_i32_1 = arith.constant 0 : i32
    return %c0_i32, %c0_i32_0 : i32, i32
  }
  func.func @transform_13(%arg0: i32) -> (i32, i32) {
    %c0_i32 = arith.constant 0 : i32
    %c0_i32_0 = arith.constant 0 : i32
    %c0_i32_1 = arith.constant 0 : i32
    return %c0_i32, %c0_i32_0 : i32, i32
  }
  func.func @transform_14(%arg0: i32) -> (i32, i32) {
    %c0_i32 = arith.constant 0 : i32
    %c0_i32_0 = arith.constant 0 : i32
    %c0_i32_1 = arith.constant 0 : i32
    return %c0_i32, %c0_i32_0 : i32, i32
  }
  func.func @transform_15(%arg0: i32) -> (i32, i32, i32) {
    %c0_i32 = arith.constant 0 : i32
    %c0_i32_0 = arith.constant 0 : i32
    %c0_i32_1 = arith.constant 0 : i32
    %c0_i32_2 = arith.constant 0 : i32
    return %c0_i32, %c0_i32_0, %c0_i32_1 : i32, i32, i32
  }
}

</mosaic_0001>

<llo_original>
// kernel: anchor1_forward.1
$region0: #{anchor1_forward.1}
  #allocation0 [shape = 'u32[]', space=smem, size = 0x4, offset = 0x4, fixed_abs, tag = 'smem constant byte address 0x4 - core index']
  #allocation1 [shape = 'u32[144,128]{1,0:T(1,128)}', space=vmem, size = 0x12000, scoped, tag = 'internal scratch']
  %s0 = inlined_call_operand.vmem [shape: bf16[2,16,32], index: 0, kind: input, shape index: {}]
  %s1 = inlined_call_operand.vmem [shape: bf16[2,32,32], index: 1, kind: input, shape index: {}]
  %s2 = inlined_call_operand.vmem [shape: s32[2,1,16], index: 2, kind: input, shape index: {}]
  %s3 = inlined_call_operand.vmem [shape: s32[2,16,1], index: 3, kind: input, shape index: {}]
  %s4 = inlined_call_operand.vmem [shape: bf16[2,32,96], index: 4, kind: input, shape index: {}]
  %s5 = inlined_call_operand.vmem [shape: f32[2,1,96], index: 5, kind: input, shape index: {}]
  %s6 = inlined_call_operand.vmem [shape: bf16[2,32,32], index: 6, kind: input, shape index: {}]
  %s7 = inlined_call_operand.vmem [shape: f32[2,1,32], index: 7, kind: input, shape index: {}]
  %s8 = inlined_call_operand.vmem [shape: bf16[2,32,32], index: 8, kind: input, shape index: {}]
  %s9 = inlined_call_operand.vmem [shape: f32[2,1,32], index: 9, kind: input, shape index: {}]
  %s10 = inlined_call_operand.vmem [shape: f32[1,32], index: 10, kind: input, shape index: {}]
  %s11 = inlined_call_operand.vmem [shape: f32[1,32], index: 11, kind: input, shape index: {}]
  %s12 = inlined_call_operand.vmem [shape: f32[32,32], index: 12, kind: input, shape index: {}]
  %s13 = inlined_call_operand.vmem [shape: s32[32,1], index: 13, kind: input, shape index: {}]
  %s14 = inlined_call_operand.vmem [shape: s32[1,32], index: 14, kind: input, shape index: {}]
  %s15 = inlined_call_operand.vmem [shape: f32[2,16,32], index: 15, kind: output, shape index: {}]
  %s16 = sld [smem:[#allocation0]]
  $region70: #{anchor1_forward.1} parent=0
    _
  %s18 = ssub.s32 1, %s16
  %s19 = scalar_select 0, %s18, %s16
  // Predicated region
  $region2: #{anchor1_forward.1} parent=0 // pred_check
    _
  $region3: #{anchor1_forward.1} parent=0 // pred_check_branch
    %21 = sbr.rel (0) target = $region5
  $region4: #{anchor1_forward.1} parent=0 // pred_region
    _
  $region5: #{anchor1_forward.1} parent=0 // pred_fallthru
    _
  // Predicated region
  $region6: #{anchor1_forward.1} parent=0 // pred_check
    _
  $region7: #{anchor1_forward.1} parent=0 // pred_check_branch
    %23 = sbr.rel (0) target = $region9
  $region8: #{anchor1_forward.1} parent=0 // pred_region
    _
  $region9: #{anchor1_forward.1} parent=0 // pred_fallthru
    _
  // Predicated region
  $region10: #{anchor1_forward.1} parent=0 // pred_check
    _
  $region11: #{anchor1_forward.1} parent=0 // pred_check_branch
    %25 = sbr.rel (0) target = $region13
  $region12: #{anchor1_forward.1} parent=0 // pred_region
    _
  $region13: #{anchor1_forward.1} parent=0 // pred_fallthru
    _
  // Predicated region
  $region14: #{anchor1_forward.1} parent=0 // pred_check
    _
  $region15: #{anchor1_forward.1} parent=0 // pred_check_branch
    %27 = sbr.rel (0) target = $region17
  $region16: #{anchor1_forward.1} parent=0 // pred_region
    _
  $region17: #{anchor1_forward.1} parent=0 // pred_fallthru
    _
  // Predicated region
  $region18: #{anchor1_forward.1} parent=0 // pred_check
    _
  $region19: #{anchor1_forward.1} parent=0 // pred_check_branch
    %29 = sbr.rel (0) target = $region21
  $region20: #{anchor1_forward.1} parent=0 // pred_region
    _
  $region21: #{anchor1_forward.1} parent=0 // pred_fallthru
    _
  // Predicated region
  $region22: #{anchor1_forward.1} parent=0 // pred_check
    _
  $region23: #{anchor1_forward.1} parent=0 // pred_check_branch
    %31 = sbr.rel (0) target = $region25
  $region24: #{anchor1_forward.1} parent=0 // pred_region
    _
  $region25: #{anchor1_forward.1} parent=0 // pred_fallthru
    _
  // Predicated region
  $region26: #{anchor1_forward.1} parent=0 // pred_check
    _
  $region27: #{anchor1_forward.1} parent=0 // pred_check_branch
    %33 = sbr.rel (0) target = $region29
  $region28: #{anchor1_forward.1} parent=0 // pred_region
    _
  $region29: #{anchor1_forward.1} parent=0 // pred_fallthru
    _
  // Predicated region
  $region30: #{anchor1_forward.1} parent=0 // pred_check
    _
  $region31: #{anchor1_forward.1} parent=0 // pred_check_branch
    %35 = sbr.rel (0) target = $region33
  $region32: #{anchor1_forward.1} parent=0 // pred_region
    _
  $region33: #{anchor1_forward.1} parent=0 // pred_fallthru
    _
  // Predicated region
  $region34: #{anchor1_forward.1} parent=0 // pred_check
    _
  $region35: #{anchor1_forward.1} parent=0 // pred_check_branch
    %37 = sbr.rel (0) target = $region37
  $region36: #{anchor1_forward.1} parent=0 // pred_region
    _
  $region37: #{anchor1_forward.1} parent=0 // pred_fallthru
    _
  // Predicated region
  $region38: #{anchor1_forward.1} parent=0 // pred_check
    _
  $region39: #{anchor1_forward.1} parent=0 // pred_check_branch
    %39 = sbr.rel (0) target = $region41
  $region40: #{anchor1_forward.1} parent=0 // pred_region
    _
  $region41: #{anchor1_forward.1} parent=0 // pred_fallthru
    _
  // Predicated region
  $region42: #{anchor1_forward.1} parent=0 // pred_check
    _
  $region43: #{anchor1_forward.1} parent=0 // pred_check_branch
    %41 = sbr.rel (0) target = $region45
  $region44: #{anchor1_forward.1} parent=0 // pred_region
    _
  $region45: #{anchor1_forward.1} parent=0 // pred_fallthru
    _
  // Predicated region
  $region46: #{anchor1_forward.1} parent=0 // pred_check
    _
  $region47: #{anchor1_forward.1} parent=0 // pred_check_branch
    %43 = sbr.rel (0) target = $region49
  $region48: #{anchor1_forward.1} parent=0 // pred_region
    _
  $region49: #{anchor1_forward.1} parent=0 // pred_fallthru
    _
  // Predicated region
  $region50: #{anchor1_forward.1} parent=0 // pred_check
    _
  $region51: #{anchor1_forward.1} parent=0 // pred_check_branch
    %45 = sbr.rel (0) target = $region53
  $region52: #{anchor1_forward.1} parent=0 // pred_region
    _
  $region53: #{anchor1_forward.1} parent=0 // pred_fallthru
    _
  // Predicated region
  $region54: #{anchor1_forward.1} parent=0 // pred_check
    _
  $region55: #{anchor1_forward.1} parent=0 // pred_check_branch
    %47 = sbr.rel (0) target = $region57
  $region56: #{anchor1_forward.1} parent=0 // pred_region
    _
  $region57: #{anchor1_forward.1} parent=0 // pred_fallthru
    _
  // Predicated region
  $region58: #{anchor1_forward.1} parent=0 // pred_check
    _
  $region59: #{anchor1_forward.1} parent=0 // pred_check_branch
    %49 = sbr.rel (0) target = $region61
  $region60: #{anchor1_forward.1} parent=0 // pred_region
    _
  $region61: #{anchor1_forward.1} parent=0 // pred_fallthru
    _
  %v51 = vld [vmem:[%s10] sm:$0x1]
  %v52 = vld [vmem:[%s11] sm:$0x1]
  %v53 = vld [vmem:[%s12] sm:$0xff]
  %v54 = vld [vmem:[%s12 + $0x8] sm:$0xff]
  %v55 = vld [vmem:[%s12 + $0x10] sm:$0xff]
  %v56 = vld [vmem:[%s12 + $0x18] sm:$0xff]
  %v57 = vld [vmem:[%s13] sm:$0xff]
  %v58 = vld [vmem:[%s13 + $0x8] sm:$0xff]
  %v59 = vld [vmem:[%s13 + $0x10] sm:$0xff]
  %v60 = vld [vmem:[%s13 + $0x18] sm:$0xff]
  %v61 = vld [vmem:[%s14] sm:$0x1]
  %v62 = vld [vmem:[%s0] sm:$0xf]
  %v63 = vld [vmem:[%s0 + $0x4] sm:$0xf]
  %v64 = vld [vmem:[%s2] sm:$0x1]
  %v65 = vld [vmem:[%s3] sm:$0xff]
  %v66 = vld [vmem:[%s3 + $0x8] sm:$0xff]
  %v67 = vld [vmem:[%s4] sm:$0xf]
  %v68 = vld [vmem:[%s4 + $0x4] sm:$0xf]
  %v69 = vld [vmem:[%s4 + $0x8] sm:$0xf]
  %v70 = vld [vmem:[%s4 + $0xc] sm:$0xf]
  %v71 = vld [vmem:[%s5] sm:$0x1]
  %v73 = vlaneseq
  %v74 = vshrl.u32 %v73, 7
  %v75 = vsub.s32 0, %v74
  %v76 = vrot.slane %v71, %v75
  %v80 = vunpack.c.l.b16 %v62
  %v81 = vunpack.c.l.b16 %v63
  %v82 = vpack.c.b16 %v81, %v80
  %v87 = vunpack.c.l.b16 %v67
  %v88 = vunpack.c.l.b16 %v68
  %v89 = vunpack.c.l.b16 %v69
  %v90 = vunpack.c.l.b16 %v70
  %v91 = vpack.c.b16 %v88, %v87
  %v92 = vpack.c.b16 %v90, %v89
  %vm95 = vcmask 261120
  %v97 = vsel %vm95, %v82, 0
  %99 = vmatprep.subr.bf16.mxu0 0
  %100 = vmatpush1.bf16.msra.mxu0 %v91
  %101 = vmatprep.subr.bf16.mxu0 0
  %102 = vmatpush1.bf16.msra.mxu0 %v92
  %103 = vmatprep.subr.bf16.mxu0 0
  %104 = vmatpush1.bf16.msra.mxu0 0
  %105 = vmatprep.subr.bf16.mxu0 0
  %106 = vmatpush1.bf16.msra.mxu0 0
  %107 = vmatprep.subr.bf16.mxu0 0
  %108 = vmatpush1.bf16.msra.mxu0 0
  %109 = vmatprep.subr.bf16.mxu0 0
  %110 = vmatpush1.bf16.msra.mxu0 0
  %111 = vmatprep.subr.bf16.mxu0 0
  %112 = vmatpush1.bf16.msra.mxu0 0
  %113 = vmatprep.subr.bf16.mxu0 0
  %114 = vmatpush1.bf16.msra.mxu0 0
  %115 = vmatprep.subr.bf16.mxu0 0
  %116 = vmatpush1.bf16.msra.mxu0 0
  %117 = vmatprep.subr.bf16.mxu0 0
  %118 = vmatpush1.bf16.msra.mxu0 0
  %119 = vmatprep.subr.bf16.mxu0 0
  %120 = vmatpush1.bf16.msra.mxu0 0
  %121 = vmatprep.subr.bf16.mxu0 0
  %122 = vmatpush1.bf16.msra.mxu0 0
  %123 = vmatprep.subr.bf16.mxu0 0
  %124 = vmatpush1.bf16.msra.mxu0 0
  %125 = vmatprep.subr.bf16.mxu0 0
  %126 = vmatpush1.bf16.msra.mxu0 0
  %127 = vmatprep.subr.bf16.mxu0 0
  %128 = vmatpush1.bf16.msra.mxu0 0
  %129 = vmatprep.subr.bf16.mxu0 0
  %130 = vmatpush1.bf16.msra.mxu0 0
  %131 = vmatprep.mubr.bf16.mxu0 0
  %132 = vmatmul.mubr.bf16.gmra.mrb[0].mxu0 %v97
  %v133 = vpop.f32.mrb[0].mxu0
  %v134 = vadd.f32 %v76, %v133
  %v135 = vpop.f32.mrb[0].mxu0
  %v136 = vpop.f32.mrb[0].mxu0
  %v137 = vadd.f32 %v76, %v136
  %v138 = vpop.f32.mrb[0].mxu0
  %139 = vdwg.mxu0
  %v140 = vpack.c.bf16 %v137, %v134
  %v141 = vld [vmem:[%s1] sm:$0xf]
  %v142 = vld [vmem:[%s1 + $0x4] sm:$0xf]
  %v143 = vld [vmem:[%s1 + $0x8] sm:$0xf]
  %v144 = vld [vmem:[%s1 + $0xc] sm:$0xf]
  %v145 = vld [vmem:[%s6] sm:$0xf]
  %v146 = vld [vmem:[%s6 + $0x4] sm:$0xf]
  %v147 = vld [vmem:[%s6 + $0x8] sm:$0xf]
  %v148 = vld [vmem:[%s6 + $0xc] sm:$0xf]
  %v149 = vld [vmem:[%s7] sm:$0x1]
  %v151 = vlaneseq
  %v152 = vshrl.u32 %v151, 7
  %v153 = vsub.s32 0, %v152
  %v154 = vrot.slane %v149, %v153
  %v160 = vunpack.c.l.b16 %v141
  %v161 = vunpack.c.l.b16 %v142
  %v162 = vunpack.c.l.b16 %v143
  %v163 = vunpack.c.l.b16 %v144
  %v164 = vpack.c.b16 %v161, %v160
  %v165 = vpack.c.b16 %v163, %v162
  %v170 = vunpack.c.l.b16 %v145
  %v171 = vunpack.c.l.b16 %v146
  %v172 = vunpack.c.l.b16 %v147
  %v173 = vunpack.c.l.b16 %v148
  %v174 = vpack.c.b16 %v171, %v170
  %v175 = vpack.c.b16 %v173, %v172
  %v179 = vsel %vm95, %v164, 0
  %v182 = vsel %vm95, %v165, 0
  %184 = vmatprep.subr.bf16.mxu0 0
  %185 = vmatpush1.bf16.msra.mxu0 %v174
  %186 = vmatprep.subr.bf16.mxu0 0
  %187 = vmatpush1.bf16.msra.mxu0 %v175
  %188 = vmatprep.subr.bf16.mxu0 0
  %189 = vmatpush1.bf16.msra.mxu0 0
  %190 = vmatprep.subr.bf16.mxu0 0
  %191 = vmatpush1.bf16.msra.mxu0 0
  %192 = vmatprep.subr.bf16.mxu0 0
  %193 = vmatpush1.bf16.msra.mxu0 0
  %194 = vmatprep.subr.bf16.mxu0 0
  %195 = vmatpush1.bf16.msra.mxu0 0
  %196 = vmatprep.subr.bf16.mxu0 0
  %197 = vmatpush1.bf16.msra.mxu0 0
  %198 = vmatprep.subr.bf16.mxu0 0
  %199 = vmatpush1.bf16.msra.mxu0 0
  %200 = vmatprep.subr.bf16.mxu0 0
  %201 = vmatpush1.bf16.msra.mxu0 0
  %202 = vmatprep.subr.bf16.mxu0 0
  %203 = vmatpush1.bf16.msra.mxu0 0
  %204 = vmatprep.subr.bf16.mxu0 0
  %205 = vmatpush1.bf16.msra.mxu0 0
  %206 = vmatprep.subr.bf16.mxu0 0
  %207 = vmatpush1.bf16.msra.mxu0 0
  %208 = vmatprep.subr.bf16.mxu0 0
  %209 = vmatpush1.bf16.msra.mxu0 0
  %210 = vmatprep.subr.bf16.mxu0 0
  %211 = vmatpush1.bf16.msra.mxu0 0
  %212 = vmatprep.subr.bf16.mxu0 0
  %213 = vmatpush1.bf16.msra.mxu0 0
  %214 = vmatprep.subr.bf16.mxu0 0
  %215 = vmatpush1.bf16.msra.mxu0 0
  %216 = vmatprep.mubr.bf16.mxu0 0
  %217 = vmatmul.mubr.bf16.gmra.mrb[0].mxu0 %v179
  %v218 = vpop.f32.mrb[0].mxu0
  %v219 = vadd.f32 %v154, %v218
  %v220 = vpop.f32.mrb[0].mxu0
  %v221 = vpop.f32.mrb[0].mxu0
  %v222 = vadd.f32 %v154, %v221
  %v223 = vpop.f32.mrb[0].mxu0
  %224 = vmatprep.mubr.bf16.mxu0 0
  %225 = vmatmul.mubr.bf16.gmra.mrb[0].mxu0 %v182
  %v226 = vpop.f32.mrb[0].mxu0
  %v227 = vadd.f32 %v154, %v226
  %v228 = vpop.f32.mrb[0].mxu0
  %v229 = vpop.f32.mrb[0].mxu0
  %v230 = vadd.f32 %v154, %v229
  %v231 = vpop.f32.mrb[0].mxu0
  %232 = vdwg.mxu0
  %v233 = vmul.f32 %v219, %v53
  %v234 = vmul.f32 %v222, %v54
  %v235 = vmul.f32 %v227, %v55
  %v236 = vmul.f32 %v230, %v56
  %v237 = vpack.c.bf16 %v234, %v233
  %v238 = vpack.c.bf16 %v236, %v235
  %240 = vrot.lane.b32.xlu0 %v140, 96
  %v241 = vpop.permute.xlu0 %240
  %v243 = vsel %vm95, %v237, 0
  %v246 = vsel %vm95, %v238, 0
  %v249 = vsel %vm95, %v241, 0
  %251 = vmatprep.subr.bf16.mxu0 0
  %252 = vmatpush1.bf16.xpose.msra.mxu0 %v249
  %253 = vmatprep.subr.bf16.mxu0 0
  %254 = vmatpush1.bf16.xpose.msra.mxu0 0
  %255 = vmatprep.subr.bf16.mxu0 0
  %256 = vmatpush1.bf16.xpose.msra.mxu0 0
  %257 = vmatprep.subr.bf16.mxu0 0
  %258 = vmatpush1.bf16.xpose.msra.mxu0 0
  %259 = vmatprep.subr.bf16.mxu0 0
  %260 = vmatpush1.bf16.xpose.msra.mxu0 0
  %261 = vmatprep.subr.bf16.mxu0 0
  %262 = vmatpush1.bf16.xpose.msra.mxu0 0
  %263 = vmatprep.subr.bf16.mxu0 0
  %264 = vmatpush1.bf16.xpose.msra.mxu0 0
  %265 = vmatprep.subr.bf16.mxu0 0
  %266 = vmatpush1.bf16.xpose.msra.mxu0 0
  %267 = vmatprep.subr.bf16.mxu0 0
  %268 = vmatpush1.bf16.xpose.msra.mxu0 0
  %269 = vmatprep.subr.bf16.mxu0 0
  %270 = vmatpush1.bf16.xpose.msra.mxu0 0
  %271 = vmatprep.subr.bf16.mxu0 0
  %272 = vmatpush1.bf16.xpose.msra.mxu0 0
  %273 = vmatprep.subr.bf16.mxu0 0
  %274 = vmatpush1.bf16.xpose.msra.mxu0 0
  %275 = vmatprep.subr.bf16.mxu0 0
  %276 = vmatpush1.bf16.xpose.msra.mxu0 0
  %277 = vmatprep.subr.bf16.mxu0 0
  %278 = vmatpush1.bf16.xpose.msra.mxu0 0
  %279 = vmatprep.subr.bf16.mxu0 0
  %280 = vmatpush1.bf16.xpose.msra.mxu0 0
  %281 = vmatprep.subr.bf16.mxu0 0
  %282 = vmatpush1.bf16.xpose.msra.mxu0 0
  %283 = vmatprep.mubr.bf16.mxu0 0
  %284 = vmatmul.mubr.bf16.gmra.mrb[0].mxu0 %v243
  %v285 = vpop.f32.mrb[0].mxu0
  %v286 = vadd.f32 0.0, %v285
  %v287 = vpop.f32.mrb[0].mxu0
  %v288 = vpop.f32.mrb[0].mxu0
  %v289 = vadd.f32 0.0, %v288
  %v290 = vpop.f32.mrb[0].mxu0
  %291 = vmatprep.mubr.bf16.mxu0 0
  %292 = vmatmul.mubr.bf16.gmra.mrb[0].mxu0 %v246
  %v293 = vpop.f32.mrb[0].mxu0
  %v294 = vadd.f32 0.0, %v293
  %v295 = vpop.f32.mrb[0].mxu0
  %v296 = vpop.f32.mrb[0].mxu0
  %v297 = vadd.f32 0.0, %v296
  %v298 = vpop.f32.mrb[0].mxu0
  %299 = vdwg.mxu0
  %300 = vset.pattern.permute.xlu0 0
  %301 = vperm.xlu0 %300, %v57
  %v302 = vpop.permute.xlu0 %301
  %303 = vset.pattern.permute.xlu0 0
  %304 = vperm.xlu0 %303, %v58
  %v305 = vpop.permute.xlu0 %304
  %306 = vset.pattern.permute.xlu0 0
  %307 = vperm.xlu0 %306, %v59
  %v308 = vpop.permute.xlu0 %307
  %309 = vset.pattern.permute.xlu0 0
  %310 = vperm.xlu0 %309, %v60
  %v311 = vpop.permute.xlu0 %310
  %v312 = vlaneseq
  %v313 = vshrl.u32 %v312, 7
  %v314 = vsub.s32 0, %v313
  %v315 = vrot.slane %v64, %v314
  %vm316 = vcmp.eq.s32.totalorder %v302, %v315
  %vm317 = vcmp.eq.s32.totalorder %v305, %v315
  %vm318 = vcmp.eq.s32.totalorder %v308, %v315
  %vm319 = vcmp.eq.s32.totalorder %v311, %v315
  %v320 = vsel %vm316, 1, 0
  %v321 = vsel %vm317, 1, 0
  %v322 = vsel %vm318, 1, 0
  %v323 = vsel %vm319, 1, 0
  %v324 = vcvt.s32.f32 %v320
  %v325 = vcvt.s32.f32 %v321
  %v326 = vcvt.s32.f32 %v322
  %v327 = vcvt.s32.f32 %v323
  %v328 = vsel %vm316, %v286, -1e+30
  %v329 = vsel %vm317, %v289, -1e+30
  %v330 = vsel %vm318, %v294, -1e+30
  %v331 = vsel %vm319, %v297, -1e+30
  %vm332 = vcmask 130048
  %v333 = vsel %vm332, %v328, -inf
  %334 = vmax.xlane.f32.xlu0 %v333
  %v335 = vpop.xlane.xlu0 %334
  %v336 = vsel %vm332, %v329, -inf
  %337 = vmax.xlane.f32.xlu0 %v336
  %v338 = vpop.xlane.xlu0 %337
  %v339 = vsel %vm332, %v330, -inf
  %340 = vmax.xlane.f32.xlu0 %v339
  %v341 = vpop.xlane.xlu0 %340
  %v342 = vsel %vm332, %v331, -inf
  %343 = vmax.xlane.f32.xlu0 %v342
  %v344 = vpop.xlane.xlu0 %343
  %v345 = vsub.f32 %v328, %v335
  %v346 = vsub.f32 %v329, %v338
  %v347 = vsub.f32 %v330, %v341
  %v348 = vsub.f32 %v331, %v344
  %v349 = vmul.f32 %v345, 1.442695
  %v350 = vpow.pop %v349
  %v351 = vmul.f32 %v346, 1.442695
  %v352 = vpow.pop %v351
  %v353 = vmul.f32 %v347, 1.442695
  %v354 = vpow.pop %v353
  %v355 = vmul.f32 %v348, 1.442695
  %v356 = vpow.pop %v355
  %v357 = vmul.f32 %v350, %v324
  %v358 = vmul.f32 %v352, %v325
  %v359 = vmul.f32 %v354, %v326
  %v360 = vmul.f32 %v356, %v327
  %v361 = vsel %vm332, %v357, 0.0
  %362 = vadd.xlane.f32.xlu0 %v361
  %v363 = vpop.xlane.xlu0 %362
  %v364 = vsel %vm332, %v358, 0.0
  %365 = vadd.xlane.f32.xlu0 %v364
  %v366 = vpop.xlane.xlu0 %365
  %v367 = vsel %vm332, %v359, 0.0
  %368 = vadd.xlane.f32.xlu0 %v367
  %v369 = vpop.xlane.xlu0 %368
  %v370 = vsel %vm332, %v360, 0.0
  %371 = vadd.xlane.f32.xlu0 %v370
  %v372 = vpop.xlane.xlu0 %371
  %vm373 = vcmp.gt.f32.partialorder %v363, 0.0
  %vm374 = vcmp.gt.f32.partialorder %v366, 0.0
  %vm375 = vcmp.gt.f32.partialorder %v369, 0.0
  %vm376 = vcmp.gt.f32.partialorder %v372, 0.0
  %v377 = vsel %vm373, %v363, 1.0
  %v378 = vsel %vm374, %v366, 1.0
  %v379 = vsel %vm375, %v369, 1.0
  %v380 = vsel %vm376, %v372, 1.0
  %v381 = vrcp.pop %v377
  %v382 = vrcp.pop %v378
  %v383 = vrcp.pop %v379
  %v384 = vrcp.pop %v380
  %v385 = vpack.c.bf16 %v358, %v357
  %v386 = vpack.c.bf16 %v360, %v359
  %387 = vrot.lane.b32.xlu0 %v140, 64
  %v388 = vpop.permute.xlu0 %387
  %v391 = vsel %vm332, %v385, 0
  %v394 = vsel %vm332, %v386, 0
  %396 = vmatprep.subr.bf16.mxu0 0
  %397 = vmatpush1.bf16.msra.mxu0 %v388
  %398 = vmatprep.subr.bf16.mxu0 0
  %399 = vmatpush1.bf16.msra.mxu0 0
  %400 = vmatprep.subr.bf16.mxu0 0
  %401 = vmatpush1.bf16.msra.mxu0 0
  %402 = vmatprep.subr.bf16.mxu0 0
  %403 = vmatpush1.bf16.msra.mxu0 0
  %404 = vmatprep.subr.bf16.mxu0 0
  %405 = vmatpush1.bf16.msra.mxu0 0
  %406 = vmatprep.subr.bf16.mxu0 0
  %407 = vmatpush1.bf16.msra.mxu0 0
  %408 = vmatprep.subr.bf16.mxu0 0
  %409 = vmatpush1.bf16.msra.mxu0 0
  %410 = vmatprep.subr.bf16.mxu0 0
  %411 = vmatpush1.bf16.msra.mxu0 0
  %412 = vmatprep.subr.bf16.mxu0 0
  %413 = vmatpush1.bf16.msra.mxu0 0
  %414 = vmatprep.subr.bf16.mxu0 0
  %415 = vmatpush1.bf16.msra.mxu0 0
  %416 = vmatprep.subr.bf16.mxu0 0
  %417 = vmatpush1.bf16.msra.mxu0 0
  %418 = vmatprep.subr.bf16.mxu0 0
  %419 = vmatpush1.bf16.msra.mxu0 0
  %420 = vmatprep.subr.bf16.mxu0 0
  %421 = vmatpush1.bf16.msra.mxu0 0
  %422 = vmatprep.subr.bf16.mxu0 0
  %423 = vmatpush1.bf16.msra.mxu0 0
  %424 = vmatprep.subr.bf16.mxu0 0
  %425 = vmatpush1.bf16.msra.mxu0 0
  %426 = vmatprep.subr.bf16.mxu0 0
  %427 = vmatpush1.bf16.msra.mxu0 0
  %428 = vmatprep.mubr.bf16.mxu0 0
  %429 = vmatmul.mubr.bf16.gmra.mrb[0].mxu0 %v391
  %v430 = vpop.f32.mrb[0].mxu0
  %v431 = vadd.f32 0.0, %v430
  %v432 = vpop.f32.mrb[0].mxu0
  %v433 = vpop.f32.mrb[0].mxu0
  %v434 = vadd.f32 0.0, %v433
  %v435 = vpop.f32.mrb[0].mxu0
  %436 = vmatprep.mubr.bf16.mxu0 0
  %437 = vmatmul.mubr.bf16.gmra.mrb[0].mxu0 %v394
  %v438 = vpop.f32.mrb[0].mxu0
  %v439 = vadd.f32 0.0, %v438
  %v440 = vpop.f32.mrb[0].mxu0
  %v441 = vpop.f32.mrb[0].mxu0
  %v442 = vadd.f32 0.0, %v441
  %v443 = vpop.f32.mrb[0].mxu0
  %444 = vdwg.mxu0
  %v445 = vmul.f32 %v431, %v381
  %v446 = vmul.f32 %v434, %v382
  %v447 = vmul.f32 %v439, %v383
  %v448 = vmul.f32 %v442, %v384
  %v449 = vmul.f32 %v445, %v53
  %v450 = vmul.f32 %v446, %v54
  %v451 = vmul.f32 %v447, %v55
  %v452 = vmul.f32 %v448, %v56
  %v453 = vpack.c.bf16 %v450, %v449
  %v454 = vpack.c.bf16 %v452, %v451
  %v455 = vld [vmem:[%s8] sm:$0xf]
  %v456 = vld [vmem:[%s8 + $0x4] sm:$0xf]
  %v457 = vld [vmem:[%s8 + $0x8] sm:$0xf]
  %v458 = vld [vmem:[%s8 + $0xc] sm:$0xf]
  %v463 = vunpack.c.l.b16 %v455
  %v464 = vunpack.c.l.b16 %v456
  %v465 = vunpack.c.l.b16 %v457
  %v466 = vunpack.c.l.b16 %v458
  %v467 = vpack.c.b16 %v464, %v463
  %v468 = vpack.c.b16 %v466, %v465
  %v472 = vsel %vm95, %v453, 0
  %v475 = vsel %vm95, %v454, 0
  %477 = vmatprep.subr.bf16.mxu0 0
  %478 = vmatpush1.bf16.msra.mxu0 %v467
  %479 = vmatprep.subr.bf16.mxu0 0
  %480 = vmatpush1.bf16.msra.mxu0 %v468
  %481 = vmatprep.subr.bf16.mxu0 0
  %482 = vmatpush1.bf16.msra.mxu0 0
  %483 = vmatprep.subr.bf16.mxu0 0
  %484 = vmatpush1.bf16.msra.mxu0 0
  %485 = vmatprep.subr.bf16.mxu0 0
  %486 = vmatpush1.bf16.msra.mxu0 0
  %487 = vmatprep.subr.bf16.mxu0 0
  %488 = vmatpush1.bf16.msra.mxu0 0
  %489 = vmatprep.subr.bf16.mxu0 0
  %490 = vmatpush1.bf16.msra.mxu0 0
  %491 = vmatprep.subr.bf16.mxu0 0
  %492 = vmatpush1.bf16.msra.mxu0 0
  %493 = vmatprep.subr.bf16.mxu0 0
  %494 = vmatpush1.bf16.msra.mxu0 0
  %495 = vmatprep.subr.bf16.mxu0 0
  %496 = vmatpush1.bf16.msra.mxu0 0
  %497 = vmatprep.subr.bf16.mxu0 0
  %498 = vmatpush1.bf16.msra.mxu0 0
  %499 = vmatprep.subr.bf16.mxu0 0
  %500 = vmatpush1.bf16.msra.mxu0 0
  %501 = vmatprep.subr.bf16.mxu0 0
  %502 = vmatpush1.bf16.msra.mxu0 0
  %503 = vmatprep.subr.bf16.mxu0 0
  %504 = vmatpush1.bf16.msra.mxu0 0
  %505 = vmatprep.subr.bf16.mxu0 0
  %506 = vmatpush1.bf16.msra.mxu0 0
  %507 = vmatprep.subr.bf16.mxu0 0
  %508 = vmatpush1.bf16.msra.mxu0 0
  %509 = vmatprep.mubr.bf16.mxu0 0
  %510 = vmatmul.mubr.bf16.gmra.mrb[0].mxu0 %v472
  %v511 = vpop.f32.mrb[0].mxu0
  %v512 = vadd.f32 0.0, %v511
  %v513 = vpop.f32.mrb[0].mxu0
  %v514 = vpop.f32.mrb[0].mxu0
  %v515 = vadd.f32 0.0, %v514
  %v516 = vpop.f32.mrb[0].mxu0
  %517 = vmatprep.mubr.bf16.mxu0 0
  %518 = vmatmul.mubr.bf16.gmra.mrb[0].mxu0 %v475
  %v519 = vpop.f32.mrb[0].mxu0
  %v520 = vadd.f32 0.0, %v519
  %v521 = vpop.f32.mrb[0].mxu0
  %v522 = vpop.f32.mrb[0].mxu0
  %v523 = vadd.f32 0.0, %v522
  %v524 = vpop.f32.mrb[0].mxu0
  %525 = vdwg.mxu0
  %526 = vset.pattern.permute.xlu0 0
  %527 = vperm.xlu0 %526, %v65
  %v528 = vpop.permute.xlu0 %527
  %529 = vset.pattern.permute.xlu0 0
  %530 = vperm.xlu0 %529, %v66
  %v531 = vpop.permute.xlu0 %530
  %v532 = vlaneseq
  %v533 = vshrl.u32 %v532, 7
  %v534 = vsub.s32 0, %v533
  %v535 = vrot.slane %v61, %v534
  %vm536 = vcmp.eq.s32.totalorder %v528, %v535
  %vm537 = vcmp.eq.s32.totalorder %v531, %v535
  %v538 = vsel %vm536, 1, 0
  %v539 = vsel %vm537, 1, 0
  %v540 = vcvt.s32.f32 %v538
  %v541 = vcvt.s32.f32 %v539
  %v542 = vpack.c.bf16 %v541, %v540
  %v543 = vpack.c.bf16 %v515, %v512
  %v544 = vpack.c.bf16 %v523, %v520
  %v545 = vld [vmem:[%s9] sm:$0x1]
  %v547 = vlaneseq
  %v548 = vshrl.u32 %v547, 7
  %v549 = vsub.s32 0, %v548
  %v550 = vrot.slane %v545, %v549
  %v553 = vsel %vm95, %v542, 0
  %555 = vmatprep.subr.bf16.mxu0 0
  %556 = vmatpush1.bf16.msra.mxu0 %v543
  %557 = vmatprep.subr.bf16.mxu0 0
  %558 = vmatpush1.bf16.msra.mxu0 %v544
  %559 = vmatprep.subr.bf16.mxu0 0
  %560 = vmatpush1.bf16.msra.mxu0 0
  %561 = vmatprep.subr.bf16.mxu0 0
  %562 = vmatpush1.bf16.msra.mxu0 0
  %563 = vmatprep.subr.bf16.mxu0 0
  %564 = vmatpush1.bf16.msra.mxu0 0
  %565 = vmatprep.subr.bf16.mxu0 0
  %566 = vmatpush1.bf16.msra.mxu0 0
  %567 = vmatprep.subr.bf16.mxu0 0
  %568 = vmatpush1.bf16.msra.mxu0 0
  %569 = vmatprep.subr.bf16.mxu0 0
  %570 = vmatpush1.bf16.msra.mxu0 0
  %571 = vmatprep.subr.bf16.mxu0 0
  %572 = vmatpush1.bf16.msra.mxu0 0
  %573 = vmatprep.subr.bf16.mxu0 0
  %574 = vmatpush1.bf16.msra.mxu0 0
  %575 = vmatprep.subr.bf16.mxu0 0
  %576 = vmatpush1.bf16.msra.mxu0 0
  %577 = vmatprep.subr.bf16.mxu0 0
  %578 = vmatpush1.bf16.msra.mxu0 0
  %579 = vmatprep.subr.bf16.mxu0 0
  %580 = vmatpush1.bf16.msra.mxu0 0
  %581 = vmatprep.subr.bf16.mxu0 0
  %582 = vmatpush1.bf16.msra.mxu0 0
  %583 = vmatprep.subr.bf16.mxu0 0
  %584 = vmatpush1.bf16.msra.mxu0 0
  %585 = vmatprep.subr.bf16.mxu0 0
  %586 = vmatpush1.bf16.msra.mxu0 0
  %587 = vmatprep.mubr.bf16.mxu0 0
  %588 = vmatmul.mubr.bf16.gmra.mrb[0].mxu0 %v553
  %v589 = vpop.f32.mrb[0].mxu0
  %v590 = vadd.f32 %v550, %v589
  %v591 = vpop.f32.mrb[0].mxu0
  %v592 = vpop.f32.mrb[0].mxu0
  %v593 = vadd.f32 %v550, %v592
  %v594 = vpop.f32.mrb[0].mxu0
  %595 = vdwg.mxu0
  %v596 = vmul.f32 %v134, %v590
  %v597 = vmul.f32 %v137, %v593
  %v598 = vsel %vm95, %v596, 0.0
  %599 = vadd.xlane.f32.xlu0 %v598
  %v600 = vpop.xlane.xlu0 %599
  %v601 = vsel %vm95, %v597, 0.0
  %602 = vadd.xlane.f32.xlu0 %v601
  %v603 = vpop.xlane.xlu0 %602
  %v604 = vrcp.pop 32.0
  %v605 = vmul.f32 %v600, %v604
  %v606 = vmul.f32 %v603, %v604
  %v607 = vsub.f32 %v596, %v605
  %v608 = vsub.f32 %v597, %v606
  %v609 = vmul.f32 %v607, %v607
  %v610 = vmul.f32 %v608, %v608
  %v611 = vsel %vm95, %v609, 0.0
  %612 = vadd.xlane.f32.xlu0 %v611
  %v613 = vpop.xlane.xlu0 %612
  %v614 = vsel %vm95, %v610, 0.0
  %615 = vadd.xlane.f32.xlu0 %v614
  %v616 = vpop.xlane.xlu0 %615
  %v617 = vmul.f32 %v613, %v604
  %v618 = vmul.f32 %v616, %v604
  %v619 = vadd.f32 %v617, 1e-05
  %v620 = vadd.f32 %v618, 1e-05
  %v621 = vrsqrt.pop %v619
  %v622 = vrsqrt.pop %v620
  %v623 = vmul.f32 %v607, %v621
  %v624 = vmul.f32 %v608, %v622
  %v626 = vlaneseq
  %v627 = vshrl.u32 %v626, 7
  %v628 = vsub.s32 0, %v627
  %v629 = vrot.slane %v51, %v628
  %v631 = vmul.f32 %v623, %v629
  %v632 = vmul.f32 %v624, %v629
  %v634 = vlaneseq
  %v635 = vshrl.u32 %v634, 7
  %v636 = vsub.s32 0, %v635
  %v637 = vrot.slane %v52, %v636
  %v639 = vadd.f32 %v631, %v637
  %v640 = vadd.f32 %v632, %v637
  %641 = vst.msk [vmem:[%s15] sm:$0xff] %vm95, %v639
  %642 = vst.msk [vmem:[%s15 + $0x8] sm:$0xff] %vm95, %v640
  %s643 = scalar_lea.vmem %s0, 8
  %v644 = vld [vmem:[%s643] sm:$0xf]
  %v645 = vld [vmem:[%s643 + $0x4] sm:$0xf]
  %s646 = scalar_lea.vmem %s2, 1
  %v647 = vld [vmem:[%s646] sm:$0x1]
  %s648 = scalar_lea.vmem %s3, 16
  %v649 = vld [vmem:[%s648] sm:$0xff]
  %v650 = vld [vmem:[%s648 + $0x8] sm:$0xff]
  %s651 = scalar_lea.vmem %s4, 16
  %v652 = vld [vmem:[%s651] sm:$0xf]
  %v653 = vld [vmem:[%s651 + $0x4] sm:$0xf]
  %v654 = vld [vmem:[%s651 + $0x8] sm:$0xf]
  %v655 = vld [vmem:[%s651 + $0xc] sm:$0xf]
  %s656 = scalar_lea.vmem %s5, 1
  %v657 = vld [vmem:[%s656] sm:$0x1]
  %v659 = vlaneseq
  %v660 = vshrl.u32 %v659, 7
  %v661 = vsub.s32 0, %v660
  %v662 = vrot.slane %v657, %v661
  %v666 = vunpack.c.l.b16 %v644
  %v667 = vunpack.c.l.b16 %v645
  %v668 = vpack.c.b16 %v667, %v666
  %v673 = vunpack.c.l.b16 %v652
  %v674 = vunpack.c.l.b16 %v653
  %v675 = vunpack.c.l.b16 %v654
  %v676 = vunpack.c.l.b16 %v655
  %v677 = vpack.c.b16 %v674, %v673
  %v678 = vpack.c.b16 %v676, %v675
  %v682 = vsel %vm95, %v668, 0
  %684 = vmatprep.subr.bf16.mxu0 0
  %685 = vmatpush1.bf16.msra.mxu0 %v677
  %686 = vmatprep.subr.bf16.mxu0 0
  %687 = vmatpush1.bf16.msra.mxu0 %v678
  %688 = vmatprep.subr.bf16.mxu0 0
  %689 = vmatpush1.bf16.msra.mxu0 0
  %690 = vmatprep.subr.bf16.mxu0 0
  %691 = vmatpush1.bf16.msra.mxu0 0
  %692 = vmatprep.subr.bf16.mxu0 0
  %693 = vmatpush1.bf16.msra.mxu0 0
  %694 = vmatprep.subr.bf16.mxu0 0
  %695 = vmatpush1.bf16.msra.mxu0 0
  %696 = vmatprep.subr.bf16.mxu0 0
  %697 = vmatpush1.bf16.msra.mxu0 0
  %698 = vmatprep.subr.bf16.mxu0 0
  %699 = vmatpush1.bf16.msra.mxu0 0
  %700 = vmatprep.subr.bf16.mxu0 0
  %701 = vmatpush1.bf16.msra.mxu0 0
  %702 = vmatprep.subr.bf16.mxu0 0
  %703 = vmatpush1.bf16.msra.mxu0 0
  %704 = vmatprep.subr.bf16.mxu0 0
  %705 = vmatpush1.bf16.msra.mxu0 0
  %706 = vmatprep.subr.bf16.mxu0 0
  %707 = vmatpush1.bf16.msra.mxu0 0
  %708 = vmatprep.subr.bf16.mxu0 0
  %709 = vmatpush1.bf16.msra.mxu0 0
  %710 = vmatprep.subr.bf16.mxu0 0
  %711 = vmatpush1.bf16.msra.mxu0 0
  %712 = vmatprep.subr.bf16.mxu0 0
  %713 = vmatpush1.bf16.msra.mxu0 0
  %714 = vmatprep.subr.bf16.mxu0 0
  %715 = vmatpush1.bf16.msra.mxu0 0
  %716 = vmatprep.mubr.bf16.mxu0 0
  %717 = vmatmul.mubr.bf16.gmra.mrb[0].mxu0 %v682
  %v718 = vpop.f32.mrb[0].mxu0
  %v719 = vadd.f32 %v662, %v718
  %v720 = vpop.f32.mrb[0].mxu0
  %v721 = vpop.f32.mrb[0].mxu0
  %v722 = vadd.f32 %v662, %v721
  %v723 = vpop.f32.mrb[0].mxu0
  %724 = vdwg.mxu0
  %v725 = vpack.c.bf16 %v722, %v719
  %s726 = scalar_lea.vmem %s1, 16
  %v727 = vld [vmem:[%s726] sm:$0xf]
  %v728 = vld [vmem:[%s726 + $0x4] sm:$0xf]
  %v729 = vld [vmem:[%s726 + $0x8] sm:$0xf]
  %v730 = vld [vmem:[%s726 + $0xc] sm:$0xf]
  %s731 = scalar_lea.vmem %s6, 16
  %v732 = vld [vmem:[%s731] sm:$0xf]
  %v733 = vld [vmem:[%s731 + $0x4] sm:$0xf]
  %v734 = vld [vmem:[%s731 + $0x8] sm:$0xf]
  %v735 = vld [vmem:[%s731 + $0xc] sm:$0xf]
  %s736 = scalar_lea.vmem %s7, 1
  %v737 = vld [vmem:[%s736] sm:$0x1]
  %v739 = vlaneseq
  %v740 = vshrl.u32 %v739, 7
  %v741 = vsub.s32 0, %v740
  %v742 = vrot.slane %v737, %v741
  %v748 = vunpack.c.l.b16 %v727
  %v749 = vunpack.c.l.b16 %v728
  %v750 = vunpack.c.l.b16 %v729
  %v751 = vunpack.c.l.b16 %v730
  %v752 = vpack.c.b16 %v749, %v748
  %v753 = vpack.c.b16 %v751, %v750
  %v758 = vunpack.c.l.b16 %v732
  %v759 = vunpack.c.l.b16 %v733
  %v760 = vunpack.c.l.b16 %v734
  %v761 = vunpack.c.l.b16 %v735
  %v762 = vpack.c.b16 %v759, %v758
  %v763 = vpack.c.b16 %v761, %v760
  %v767 = vsel %vm95, %v752, 0
  %v770 = vsel %vm95, %v753, 0
  %772 = vmatprep.subr.bf16.mxu0 0
  %773 = vmatpush1.bf16.msra.mxu0 %v762
  %774 = vmatprep.subr.bf16.mxu0 0
  %775 = vmatpush1.bf16.msra.mxu0 %v763
  %776 = vmatprep.subr.bf16.mxu0 0
  %777 = vmatpush1.bf16.msra.mxu0 0
  %778 = vmatprep.subr.bf16.mxu0 0
  %779 = vmatpush1.bf16.msra.mxu0 0
  %780 = vmatprep.subr.bf16.mxu0 0
  %781 = vmatpush1.bf16.msra.mxu0 0
  %782 = vmatprep.subr.bf16.mxu0 0
  %783 = vmatpush1.bf16.msra.mxu0 0
  %784 = vmatprep.subr.bf16.mxu0 0
  %785 = vmatpush1.bf16.msra.mxu0 0
  %786 = vmatprep.subr.bf16.mxu0 0
  %787 = vmatpush1.bf16.msra.mxu0 0
  %788 = vmatprep.subr.bf16.mxu0 0
  %789 = vmatpush1.bf16.msra.mxu0 0
  %790 = vmatprep.subr.bf16.mxu0 0
  %791 = vmatpush1.bf16.msra.mxu0 0
  %792 = vmatprep.subr.bf16.mxu0 0
  %793 = vmatpush1.bf16.msra.mxu0 0
  %794 = vmatprep.subr.bf16.mxu0 0
  %795 = vmatpush1.bf16.msra.mxu0 0
  %796 = vmatprep.subr.bf16.mxu0 0
  %797 = vmatpush1.bf16.msra.mxu0 0
  %798 = vmatprep.subr.bf16.mxu0 0
  %799 = vmatpush1.bf16.msra.mxu0 0
  %800 = vmatprep.subr.bf16.mxu0 0
  %801 = vmatpush1.bf16.msra.mxu0 0
  %802 = vmatprep.subr.bf16.mxu0 0
  %803 = vmatpush1.bf16.msra.mxu0 0
  %804 = vmatprep.mubr.bf16.mxu0 0
  %805 = vmatmul.mubr.bf16.gmra.mrb[0].mxu0 %v767
  %v806 = vpop.f32.mrb[0].mxu0
  %v807 = vadd.f32 %v742, %v806
  %v808 = vpop.f32.mrb[0].mxu0
  %v809 = vpop.f32.mrb[0].mxu0
  %v810 = vadd.f32 %v742, %v809
  %v811 = vpop.f32.mrb[0].mxu0
  %812 = vmatprep.mubr.bf16.mxu0 0
  %813 = vmatmul.mubr.bf16.gmra.mrb[0].mxu0 %v770
  %v814 = vpop.f32.mrb[0].mxu0
  %v815 = vadd.f32 %v742, %v814
  %v816 = vpop.f32.mrb[0].mxu0
  %v817 = vpop.f32.mrb[0].mxu0
  %v818 = vadd.f32 %v742, %v817
  %v819 = vpop.f32.mrb[0].mxu0
  %820 = vdwg.mxu0
  %v821 = vmul.f32 %v807, %v53
  %v822 = vmul.f32 %v810, %v54
  %v823 = vmul.f32 %v815, %v55
  %v824 = vmul.f32 %v818, %v56
  %v825 = vpack.c.bf16 %v822, %v821
  %v826 = vpack.c.bf16 %v824, %v823
  %828 = vrot.lane.b32.xlu0 %v725, 96
  %v829 = vpop.permute.xlu0 %828
  %v831 = vsel %vm95, %v825, 0
  %v834 = vsel %vm95, %v826, 0
  %v837 = vsel %vm95, %v829, 0
  %839 = vmatprep.subr.bf16.mxu0 0
  %840 = vmatpush1.bf16.xpose.msra.mxu0 %v837
  %841 = vmatprep.subr.bf16.mxu0 0
  %842 = vmatpush1.bf16.xpose.msra.mxu0 0
  %843 = vmatprep.subr.bf16.mxu0 0
  %844 = vmatpush1.bf16.xpose.msra.mxu0 0
  %845 = vmatprep.subr.bf16.mxu0 0
  %846 = vmatpush1.bf16.xpose.msra.mxu0 0
  %847 = vmatprep.subr.bf16.mxu0 0
  %848 = vmatpush1.bf16.xpose.msra.mxu0 0
  %849 = vmatprep.subr.bf16.mxu0 0
  %850 = vmatpush1.bf16.xpose.msra.mxu0 0
  %851 = vmatprep.subr.bf16.mxu0 0
  %852 = vmatpush1.bf16.xpose.msra.mxu0 0
  %853 = vmatprep.subr.bf16.mxu0 0
  %854 = vmatpush1.bf16.xpose.msra.mxu0 0
  %855 = vmatprep.subr.bf16.mxu0 0
  %856 = vmatpush1.bf16.xpose.msra.mxu0 0
  %857 = vmatprep.subr.bf16.mxu0 0
  %858 = vmatpush1.bf16.xpose.msra.mxu0 0
  %859 = vmatprep.subr.bf16.mxu0 0
  %860 = vmatpush1.bf16.xpose.msra.mxu0 0
  %861 = vmatprep.subr.bf16.mxu0 0
  %862 = vmatpush1.bf16.xpose.msra.mxu0 0
  %863 = vmatprep.subr.bf16.mxu0 0
  %864 = vmatpush1.bf16.xpose.msra.mxu0 0
  %865 = vmatprep.subr.bf16.mxu0 0
  %866 = vmatpush1.bf16.xpose.msra.mxu0 0
  %867 = vmatprep.subr.bf16.mxu0 0
  %868 = vmatpush1.bf16.xpose.msra.mxu0 0
  %869 = vmatprep.subr.bf16.mxu0 0
  %870 = vmatpush1.bf16.xpose.msra.mxu0 0
  %871 = vmatprep.mubr.bf16.mxu0 0
  %872 = vmatmul.mubr.bf16.gmra.mrb[0].mxu0 %v831
  %v873 = vpop.f32.mrb[0].mxu0
  %v874 = vadd.f32 0.0, %v873
  %v875 = vpop.f32.mrb[0].mxu0
  %v876 = vpop.f32.mrb[0].mxu0
  %v877 = vadd.f32 0.0, %v876
  %v878 = vpop.f32.mrb[0].mxu0
  %879 = vmatprep.mubr.bf16.mxu0 0
  %880 = vmatmul.mubr.bf16.gmra.mrb[0].mxu0 %v834
  %v881 = vpop.f32.mrb[0].mxu0
  %v882 = vadd.f32 0.0, %v881
  %v883 = vpop.f32.mrb[0].mxu0
  %v884 = vpop.f32.mrb[0].mxu0
  %v885 = vadd.f32 0.0, %v884
  %v886 = vpop.f32.mrb[0].mxu0
  %887 = vdwg.mxu0
  %v888 = vlaneseq
  %v889 = vshrl.u32 %v888, 7
  %v890 = vsub.s32 0, %v889
  %v891 = vrot.slane %v647, %v890
  %vm892 = vcmp.eq.s32.totalorder %v302, %v891
  %vm893 = vcmp.eq.s32.totalorder %v305, %v891
  %vm894 = vcmp.eq.s32.totalorder %v308, %v891
  %vm895 = vcmp.eq.s32.totalorder %v311, %v891
  %v896 = vsel %vm892, 1, 0
  %v897 = vsel %vm893, 1, 0
  %v898 = vsel %vm894, 1, 0
  %v899 = vsel %vm895, 1, 0
  %v900 = vcvt.s32.f32 %v896
  %v901 = vcvt.s32.f32 %v897
  %v902 = vcvt.s32.f32 %v898
  %v903 = vcvt.s32.f32 %v899
  %v904 = vsel %vm892, %v874, -1e+30
  %v905 = vsel %vm893, %v877, -1e+30
  %v906 = vsel %vm894, %v882, -1e+30
  %v907 = vsel %vm895, %v885, -1e+30
  %v908 = vsel %vm332, %v904, -inf
  %909 = vmax.xlane.f32.xlu0 %v908
  %v910 = vpop.xlane.xlu0 %909
  %v911 = vsel %vm332, %v905, -inf
  %912 = vmax.xlane.f32.xlu0 %v911
  %v913 = vpop.xlane.xlu0 %912
  %v914 = vsel %vm332, %v906, -inf
  %915 = vmax.xlane.f32.xlu0 %v914
  %v916 = vpop.xlane.xlu0 %915
  %v917 = vsel %vm332, %v907, -inf
  %918 = vmax.xlane.f32.xlu0 %v917
  %v919 = vpop.xlane.xlu0 %918
  %v920 = vsub.f32 %v904, %v910
  %v921 = vsub.f32 %v905, %v913
  %v922 = vsub.f32 %v906, %v916
  %v923 = vsub.f32 %v907, %v919
  %v924 = vmul.f32 %v920, 1.442695
  %v925 = vpow.pop %v924
  %v926 = vmul.f32 %v921, 1.442695
  %v927 = vpow.pop %v926
  %v928 = vmul.f32 %v922, 1.442695
  %v929 = vpow.pop %v928
  %v930 = vmul.f32 %v923, 1.442695
  %v931 = vpow.pop %v930
  %v932 = vmul.f32 %v925, %v900
  %v933 = vmul.f32 %v927, %v901
  %v934 = vmul.f32 %v929, %v902
  %v935 = vmul.f32 %v931, %v903
  %v936 = vsel %vm332, %v932, 0.0
  %937 = vadd.xlane.f32.xlu0 %v936
  %v938 = vpop.xlane.xlu0 %937
  %v939 = vsel %vm332, %v933, 0.0
  %940 = vadd.xlane.f32.xlu0 %v939
  %v941 = vpop.xlane.xlu0 %940
  %v942 = vsel %vm332, %v934, 0.0
  %943 = vadd.xlane.f32.xlu0 %v942
  %v944 = vpop.xlane.xlu0 %943
  %v945 = vsel %vm332, %v935, 0.0
  %946 = vadd.xlane.f32.xlu0 %v945
  %v947 = vpop.xlane.xlu0 %946
  %vm948 = vcmp.gt.f32.partialorder %v938, 0.0
  %vm949 = vcmp.gt.f32.partialorder %v941, 0.0
  %vm950 = vcmp.gt.f32.partialorder %v944, 0.0
  %vm951 = vcmp.gt.f32.partialorder %v947, 0.0
  %v952 = vsel %vm948, %v938, 1.0
  %v953 = vsel %vm949, %v941, 1.0
  %v954 = vsel %vm950, %v944, 1.0
  %v955 = vsel %vm951, %v947, 1.0
  %v956 = vrcp.pop %v952
  %v957 = vrcp.pop %v953
  %v958 = vrcp.pop %v954
  %v959 = vrcp.pop %v955
  %v960 = vpack.c.bf16 %v933, %v932
  %v961 = vpack.c.bf16 %v935, %v934
  %962 = vrot.lane.b32.xlu0 %v725, 64
  %v963 = vpop.permute.xlu0 %962
  %v966 = vsel %vm332, %v960, 0
  %v969 = vsel %vm332, %v961, 0
  %971 = vmatprep.subr.bf16.mxu0 0
  %972 = vmatpush1.bf16.msra.mxu0 %v963
  %973 = vmatprep.subr.bf16.mxu0 0
  %974 = vmatpush1.bf16.msra.mxu0 0
  %975 = vmatprep.subr.bf16.mxu0 0
  %976 = vmatpush1.bf16.msra.mxu0 0
  %977 = vmatprep.subr.bf16.mxu0 0
  %978 = vmatpush1.bf16.msra.mxu0 0
  %979 = vmatprep.subr.bf16.mxu0 0
  %980 = vmatpush1.bf16.msra.mxu0 0
  %981 = vmatprep.subr.bf16.mxu0 0
  %982 = vmatpush1.bf16.msra.mxu0 0
  %983 = vmatprep.subr.bf16.mxu0 0
  %984 = vmatpush1.bf16.msra.mxu0 0
  %985 = vmatprep.subr.bf16.mxu0 0
  %986 = vmatpush1.bf16.msra.mxu0 0
  %987 = vmatprep.subr.bf16.mxu0 0
  %988 = vmatpush1.bf16.msra.mxu0 0
  %989 = vmatprep.subr.bf16.mxu0 0
  %990 = vmatpush1.bf16.msra.mxu0 0
  %991 = vmatprep.subr.bf16.mxu0 0
  %992 = vmatpush1.bf16.msra.mxu0 0
  %993 = vmatprep.subr.bf16.mxu0 0
  %994 = vmatpush1.bf16.msra.mxu0 0
  %995 = vmatprep.subr.bf16.mxu0 0
  %996 = vmatpush1.bf16.msra.mxu0 0
  %997 = vmatprep.subr.bf16.mxu0 0
  %998 = vmatpush1.bf16.msra.mxu0 0
  %999 = vmatprep.subr.bf16.mxu0 0
  %1000 = vmatpush1.bf16.msra.mxu0 0
  %1001 = vmatprep.subr.bf16.mxu0 0
  %1002 = vmatpush1.bf16.msra.mxu0 0
  %1003 = vmatprep.mubr.bf16.mxu0 0
  %1004 = vmatmul.mubr.bf16.gmra.mrb[0].mxu0 %v966
  %v1005 = vpop.f32.mrb[0].mxu0
  %v1006 = vadd.f32 0.0, %v1005
  %v1007 = vpop.f32.mrb[0].mxu0
  %v1008 = vpop.f32.mrb[0].mxu0
  %v1009 = vadd.f32 0.0, %v1008
  %v1010 = vpop.f32.mrb[0].mxu0
  %1011 = vmatprep.mubr.bf16.mxu0 0
  %1012 = vmatmul.mubr.bf16.gmra.mrb[0].mxu0 %v969
  %v1013 = vpop.f32.mrb[0].mxu0
  %v1014 = vadd.f32 0.0, %v1013
  %v1015 = vpop.f32.mrb[0].mxu0
  %v1016 = vpop.f32.mrb[0].mxu0
  %v1017 = vadd.f32 0.0, %v1016
  %v1018 = vpop.f32.mrb[0].mxu0
  %1019 = vdwg.mxu0
  %v1020 = vmul.f32 %v1006, %v956
  %v1021 = vmul.f32 %v1009, %v957
  %v1022 = vmul.f32 %v1014, %v958
  %v1023 = vmul.f32 %v1017, %v959
  %v1024 = vmul.f32 %v1020, %v53
  %v1025 = vmul.f32 %v1021, %v54
  %v1026 = vmul.f32 %v1022, %v55
  %v1027 = vmul.f32 %v1023, %v56
  %v1028 = vpack.c.bf16 %v1025, %v1024
  %v1029 = vpack.c.bf16 %v1027, %v1026
  %s1030 = scalar_lea.vmem %s8, 16
  %v1031 = vld [vmem:[%s1030] sm:$0xf]
  %v1032 = vld [vmem:[%s1030 + $0x4] sm:$0xf]
  %v1033 = vld [vmem:[%s1030 + $0x8] sm:$0xf]
  %v1034 = vld [vmem:[%s1030 + $0xc] sm:$0xf]
  %v1039 = vunpack.c.l.b16 %v1031
  %v1040 = vunpack.c.l.b16 %v1032
  %v1041 = vunpack.c.l.b16 %v1033
  %v1042 = vunpack.c.l.b16 %v1034
  %v1043 = vpack.c.b16 %v1040, %v1039
  %v1044 = vpack.c.b16 %v1042, %v1041
  %v1048 = vsel %vm95, %v1028, 0
  %v1051 = vsel %vm95, %v1029, 0
  %1053 = vmatprep.subr.bf16.mxu0 0
  %1054 = vmatpush1.bf16.msra.mxu0 %v1043
  %1055 = vmatprep.subr.bf16.mxu0 0
  %1056 = vmatpush1.bf16.msra.mxu0 %v1044
  %1057 = vmatprep.subr.bf16.mxu0 0
  %1058 = vmatpush1.bf16.msra.mxu0 0
  %1059 = vmatprep.subr.bf16.mxu0 0
  %1060 = vmatpush1.bf16.msra.mxu0 0
  %1061 = vmatprep.subr.bf16.mxu0 0
  %1062 = vmatpush1.bf16.msra.mxu0 0
  %1063 = vmatprep.subr.bf16.mxu0 0
  %1064 = vmatpush1.bf16.msra.mxu0 0
  %1065 = vmatprep.subr.bf16.mxu0 0
  %1066 = vmatpush1.bf16.msra.mxu0 0
  %1067 = vmatprep.subr.bf16.mxu0 0
  %1068 = vmatpush1.bf16.msra.mxu0 0
  %1069 = vmatprep.subr.bf16.mxu0 0
  %1070 = vmatpush1.bf16.msra.mxu0 0
  %1071 = vmatprep.subr.bf16.mxu0 0
  %1072 = vmatpush1.bf16.msra.mxu0 0
  %1073 = vmatprep.subr.bf16.mxu0 0
  %1074 = vmatpush1.bf16.msra.mxu0 0
  %1075 = vmatprep.subr.bf16.mxu0 0
  %1076 = vmatpush1.bf16.msra.mxu0 0
  %1077 = vmatprep.subr.bf16.mxu0 0
  %1078 = vmatpush1.bf16.msra.mxu0 0
  %1079 = vmatprep.subr.bf16.mxu0 0
  %1080 = vmatpush1.bf16.msra.mxu0 0
  %1081 = vmatprep.subr.bf16.mxu0 0
  %1082 = vmatpush1.bf16.msra.mxu0 0
  %1083 = vmatprep.subr.bf16.mxu0 0
  %1084 = vmatpush1.bf16.msra.mxu0 0
  %1085 = vmatprep.mubr.bf16.mxu0 0
  %1086 = vmatmul.mubr.bf16.gmra.mrb[0].mxu0 %v1048
  %v1087 = vpop.f32.mrb[0].mxu0
  %v1088 = vadd.f32 0.0, %v1087
  %v1089 = vpop.f32.mrb[0].mxu0
  %v1090 = vpop.f32.mrb[0].mxu0
  %v1091 = vadd.f32 0.0, %v1090
  %v1092 = vpop.f32.mrb[0].mxu0
  %1093 = vmatprep.mubr.bf16.mxu0 0
  %1094 = vmatmul.mubr.bf16.gmra.mrb[0].mxu0 %v1051
  %v1095 = vpop.f32.mrb[0].mxu0
  %v1096 = vadd.f32 0.0, %v1095
  %v1097 = vpop.f32.mrb[0].mxu0
  %v1098 = vpop.f32.mrb[0].mxu0
  %v1099 = vadd.f32 0.0, %v1098
  %v1100 = vpop.f32.mrb[0].mxu0
  %1101 = vdwg.mxu0
  %1102 = vset.pattern.permute.xlu0 0
  %1103 = vperm.xlu0 %1102, %v649
  %v1104 = vpop.permute.xlu0 %1103
  %1105 = vset.pattern.permute.xlu0 0
  %1106 = vperm.xlu0 %1105, %v650
  %v1107 = vpop.permute.xlu0 %1106
  %vm1108 = vcmp.eq.s32.totalorder %v1104, %v535
  %vm1109 = vcmp.eq.s32.totalorder %v1107, %v535
  %v1110 = vsel %vm1108, 1, 0
  %v1111 = vsel %vm1109, 1, 0
  %v1112 = vcvt.s32.f32 %v1110
  %v1113 = vcvt.s32.f32 %v1111
  %v1114 = vpack.c.bf16 %v1113, %v1112
  %v1115 = vpack.c.bf16 %v1091, %v1088
  %v1116 = vpack.c.bf16 %v1099, %v1096
  %s1117 = scalar_lea.vmem %s9, 1
  %v1118 = vld [vmem:[%s1117] sm:$0x1]
  %v1120 = vlaneseq
  %v1121 = vshrl.u32 %v1120, 7
  %v1122 = vsub.s32 0, %v1121
  %v1123 = vrot.slane %v1118, %v1122
  %v1126 = vsel %vm95, %v1114, 0
  %1128 = vmatprep.subr.bf16.mxu0 0
  %1129 = vmatpush1.bf16.msra.mxu0 %v1115
  %1130 = vmatprep.subr.bf16.mxu0 0
  %1131 = vmatpush1.bf16.msra.mxu0 %v1116
  %1132 = vmatprep.subr.bf16.mxu0 0
  %1133 = vmatpush1.bf16.msra.mxu0 0
  %1134 = vmatprep.subr.bf16.mxu0 0
  %1135 = vmatpush1.bf16.msra.mxu0 0
  %1136 = vmatprep.subr.bf16.mxu0 0
  %1137 = vmatpush1.bf16.msra.mxu0 0
  %1138 = vmatprep.subr.bf16.mxu0 0
  %1139 = vmatpush1.bf16.msra.mxu0 0
  %1140 = vmatprep.subr.bf16.mxu0 0
  %1141 = vmatpush1.bf16.msra.mxu0 0
  %1142 = vmatprep.subr.bf16.mxu0 0
  %1143 = vmatpush1.bf16.msra.mxu0 0
  %1144 = vmatprep.subr.bf16.mxu0 0
  %1145 = vmatpush1.bf16.msra.mxu0 0
  %1146 = vmatprep.subr.bf16.mxu0 0
  %1147 = vmatpush1.bf16.msra.mxu0 0
  %1148 = vmatprep.subr.bf16.mxu0 0
  %1149 = vmatpush1.bf16.msra.mxu0 0
  %1150 = vmatprep.subr.bf16.mxu0 0
  %1151 = vmatpush1.bf16.msra.mxu0 0
  %1152 = vmatprep.subr.bf16.mxu0 0
  %1153 = vmatpush1.bf16.msra.mxu0 0
  %1154 = vmatprep.subr.bf16.mxu0 0
  %1155 = vmatpush1.bf16.msra.mxu0 0
  %1156 = vmatprep.subr.bf16.mxu0 0
  %1157 = vmatpush1.bf16.msra.mxu0 0
  %1158 = vmatprep.subr.bf16.mxu0 0
  %1159 = vmatpush1.bf16.msra.mxu0 0
  %1160 = vmatprep.mubr.bf16.mxu0 0
  %1161 = vmatmul.mubr.bf16.gmra.mrb[0].mxu0 %v1126
  %v1162 = vpop.f32.mrb[0].mxu0
  %v1163 = vadd.f32 %v1123, %v1162
  %v1164 = vpop.f32.mrb[0].mxu0
  %v1165 = vpop.f32.mrb[0].mxu0
  %v1166 = vadd.f32 %v1123, %v1165
  %v1167 = vpop.f32.mrb[0].mxu0
  %1168 = vdwg.mxu0
  %v1169 = vmul.f32 %v719, %v1163
  %v1170 = vmul.f32 %v722, %v1166
  %v1171 = vsel %vm95, %v1169, 0.0
  %1172 = vadd.xlane.f32.xlu0 %v1171
  %v1173 = vpop.xlane.xlu0 %1172
  %v1174 = vsel %vm95, %v1170, 0.0
  %1175 = vadd.xlane.f32.xlu0 %v1174
  %v1176 = vpop.xlane.xlu0 %1175
  %v1177 = vmul.f32 %v1173, %v604
  %v1178 = vmul.f32 %v1176, %v604
  %v1179 = vsub.f32 %v1169, %v1177
  %v1180 = vsub.f32 %v1170, %v1178
  %v1181 = vmul.f32 %v1179, %v1179
  %v1182 = vmul.f32 %v1180, %v1180
  %v1183 = vsel %vm95, %v1181, 0.0
  %1184 = vadd.xlane.f32.xlu0 %v1183
  %v1185 = vpop.xlane.xlu0 %1184
  %v1186 = vsel %vm95, %v1182, 0.0
  %1187 = vadd.xlane.f32.xlu0 %v1186
  %v1188 = vpop.xlane.xlu0 %1187
  %v1189 = vmul.f32 %v1185, %v604
  %v1190 = vmul.f32 %v1188, %v604
  %v1191 = vadd.f32 %v1189, 1e-05
  %v1192 = vadd.f32 %v1190, 1e-05
  %v1193 = vrsqrt.pop %v1191
  %v1194 = vrsqrt.pop %v1192
  %v1195 = vmul.f32 %v1179, %v1193
  %v1196 = vmul.f32 %v1180, %v1194
  %v1197 = vmul.f32 %v1195, %v629
  %v1198 = vmul.f32 %v1196, %v629
  %v1199 = vadd.f32 %v1197, %v637
  %v1200 = vadd.f32 %v1198, %v637
  %s1201 = scalar_lea.vmem %s15, 16
  %1202 = vst.msk [vmem:[%s1201] sm:$0xff] %vm95, %v1199
  %1203 = vst.msk [vmem:[%s1201 + $0x8] sm:$0xff] %vm95, %v1200
  // Predicated region
  $region62: #{anchor1_forward.1} parent=0 // pred_check
    _
  $region63: #{anchor1_forward.1} parent=0 // pred_check_branch
    %1205 = sbr.rel (0) target = $region65
  $region64: #{anchor1_forward.1} parent=0 // pred_region
    _
  $region65: #{anchor1_forward.1} parent=0 // pred_fallthru
    _
  // Predicated region
  $region66: #{anchor1_forward.1} parent=0 // pred_check
    _
  $region67: #{anchor1_forward.1} parent=0 // pred_check_branch
    %1207 = sbr.rel (0) target = $region69
  $region68: #{anchor1_forward.1} parent=0 // pred_region
    _
  $region69: #{anchor1_forward.1} parent=0 // pred_fallthru
    _

</llo_original>
